<compile_context>
chip_gen: v5e
topology: v5e:2x2
jax: 0.10.0
libtpu: 0.0.40
codegen_flags: <defaults>
</compile_context>

<pallas_src>
import functools

import jax
import jax.numpy as jnp
from jax.experimental import pallas as pl
from jax.experimental.pallas import tpu as pltpu


_VMEM_LIMIT = 48 * 1024 * 1024  # headroom under v7x's 64 MiB physical VMEM


def _pick_tile(dim, preferred):
    """Largest tile <= preferred that divides dim and is a multiple of 8; else full dim."""
    if dim <= preferred:
        return dim
    t = (preferred // 8) * 8
    while t >= 8:
        if dim % t == 0:
            return t
        t -= 8
    return dim


# ----------------------------------------------------------------------------
# Stage 1: qkv = x @ Wqkv^T   (scale pre-folded into the Q columns of Wqkv^T)
# ----------------------------------------------------------------------------
def _qkv_gemm_kernel(x_ref, w_ref, o_ref):
    x = x_ref[...].astype(jnp.bfloat16)          # cast activations once, in-kernel
    acc = jnp.dot(x, w_ref[...], preferred_element_type=jnp.float32)
    o_ref[...] = acc.astype(o_ref.dtype)


def _qkv_gemm(x2d, wqkv_t_bf16):
    M, C = x2d.shape
    N3 = wqkv_t_bf16.shape[1]
    tm = _pick_tile(M, 256)
    return pl.pallas_call(
        _qkv_gemm_kernel,
        out_shape=jax.ShapeDtypeStruct((M, N3), jnp.bfloat16),
        grid_spec=pltpu.PrefetchScalarGridSpec(
            num_scalar_prefetch=0,
            grid=(M // tm,),
            in_specs=[
                pl.BlockSpec((tm, C), lambda i: (i, 0)),
                pl.BlockSpec((C, N3), lambda i: (0, 0)),
            ],
            out_specs=pl.BlockSpec((tm, N3), lambda i: (i, 0)),
        ),
        compiler_params=pltpu.CompilerParams(
            dimension_semantics=("parallel",),
            vmem_limit_bytes=_VMEM_LIMIT),
    )(x2d, wqkv_t_bf16)


# ----------------------------------------------------------------------------
# Stage 2: fused flash attention (all heads per block) + output projection
#          grid = (B, q_tiles, kv_tiles)
# ----------------------------------------------------------------------------
def _attn_proj_kernel(q_ref, k_ref, v_ref, wp_ref, b_ref, o_ref, m_sc, l_sc, acc_sc):
    ki = pl.program_id(2)

    @pl.when(ki == 0)
    def _():
        m_sc[...] = jnp.full(m_sc.shape, -jnp.inf, dtype=m_sc.dtype)
        l_sc[...] = jnp.zeros(l_sc.shape, dtype=l_sc.dtype)
        acc_sc[...] = jnp.zeros(acc_sc.shape, dtype=acc_sc.dtype)

    q = q_ref[0]                                  # (H, tq, hd) bf16, scale pre-folded
    k = k_ref[0]                                  # (H, tk, hd) bf16
    v = v_ref[0]                                  # (H, tk, hd) bf16

    # scores s[h] = q[h] @ k[h]^T   (batched over heads, f32 accumulation on the MXU)
    s = jnp.einsum("hqd,hkd->hqk", q, k, preferred_element_type=jnp.float32)

    m_prev = m_sc[...]
    m_new = jnp.maximum(m_prev, jnp.max(s, axis=-1, keepdims=True))
    alpha = jnp.exp(m_prev - m_new)
    p = jnp.exp(s - m_new)
    l_sc[...] = alpha * l_sc[...] + jnp.sum(p, axis=-1, keepdims=True)
    acc_sc[...] = alpha * acc_sc[...] + jnp.einsum(
        "hqk,hkd->hqd", p.astype(v.dtype), v, preferred_element_type=jnp.float32)
    m_sc[...] = m_new

    @pl.when(ki == pl.num_programs(2) - 1)
    def _():
        inv_l = pl.reciprocal(l_sc[...], approx=True)       # EUP slot, otherwise idle
        attn = (acc_sc[...] * inv_l).astype(jnp.bfloat16)    # (H, tq, hd)
        wp = wp_ref[...]                                     # (H, hd, C) bf16
        n_heads = attn.shape[0]
        # head-merge + projection without any in-kernel relayout:
        # y = sum_h attn[h] @ WprojT[h*hd:(h+1)*hd, :]
        y = jnp.dot(attn[0], wp[0], preferred_element_type=jnp.float32)
        for h in range(1, n_heads):
            y = y + jnp.dot(attn[h], wp[h], preferred_element_type=jnp.float32)
        y = y + b_ref[...].astype(jnp.float32)
        o_ref[0] = y.astype(o_ref.dtype)                     # lane-dense (tq, C) store


def _flash_attention_proj(q, k, v, wproj3_bf16, bproj_2d, out_dtype):
    """q, k, v: (B, H, N, hd) bf16; wproj3: (H, hd, C) bf16 -> (B, N, C) out_dtype."""
    B, H, N, hd = q.shape
    C = H * hd
    tq = _pick_tile(N, 128)
    tk = _pick_tile(N, 128)
    grid = (B, N // tq, N // tk)
    return pl.pallas_call(
        _attn_proj_kernel,
        out_shape=jax.ShapeDtypeStruct((B, N, C), out_dtype),
        grid_spec=pltpu.PrefetchScalarGridSpec(
            num_scalar_prefetch=0,
            grid=grid,
            in_specs=[
                pl.BlockSpec((1, H, tq, hd), lambda b, qi, ki: (b, 0, qi, 0)),
                pl.BlockSpec((1, H, tk, hd), lambda b, qi, ki: (b, 0, ki, 0)),
                pl.BlockSpec((1, H, tk, hd), lambda b, qi, ki: (b, 0, ki, 0)),
                pl.BlockSpec((H, hd, C), lambda b, qi, ki: (0, 0, 0)),
                pl.BlockSpec((1, C), lambda b, qi, ki: (0, 0)),
            ],
            out_specs=pl.BlockSpec((1, tq, C), lambda b, qi, ki: (b, qi, 0)),
            scratch_shapes=[
                pltpu.VMEM((H, tq, 1), jnp.float32),    # running max m
                pltpu.VMEM((H, tq, 1), jnp.float32),    # running denom l
                pltpu.VMEM((H, tq, hd), jnp.float32),   # output accumulator
            ],
        ),
        compiler_params=pltpu.CompilerParams(
            dimension_semantics=("parallel", "parallel", "arbitrary"),
            vmem_limit_bytes=_VMEM_LIMIT),
    )(q, k, v, wproj3_bf16, bproj_2d)


# ----------------------------------------------------------------------------
# Public wrapper
# ----------------------------------------------------------------------------
@functools.partial(jax.jit, static_argnames=("num_heads",))
def attention_forward(x, wqkv, wproj, bproj, *, num_heads):
    """x: (B, N, C); wqkv: (3C, C); wproj: (C, C); bproj: (C,)  (PyTorch Linear conventions)."""
    B, N, C = x.shape
    hd = C // num_heads
    scale = hd ** (-0.5)

    # --- weight prep (one-time, outside the hot path) ---
    # fold softmax scale into the Q columns of Wqkv^T, then cast to bf16 for the MXU
    scale_vec = jnp.concatenate(
        [jnp.full((C,), scale, dtype=wqkv.dtype), jnp.ones((2 * C,), dtype=wqkv.dtype)])
    wqkv_t = (wqkv.T * scale_vec[None, :]).astype(jnp.bfloat16)        # (C, 3C)
    # Wproj^T split per-head along its contraction axis: (C, C) -> (H, hd, C)
    wproj3 = wproj.T.reshape(num_heads, hd, C).astype(jnp.bfloat16)
    bproj_2d = bproj.reshape(1, C)

    # --- stage 1: qkv projection (tiled GEMM) ---
    x2d = x.reshape(B * N, C)
    qkv2d = _qkv_gemm(x2d, wqkv_t)                                     # (B*N, 3C) bf16

    # --- layout plumbing: head-major q/k/v for per-(batch, q-tile) BlockSpec DMA ---
    qkv5 = qkv2d.reshape(B, N, 3, num_heads, hd).transpose(2, 0, 3, 1, 4)  # (3,B,H,N,hd)
    q, k, v = qkv5[0], qkv5[1], qkv5[2]

    # --- stage 2: fused flash attention + output projection + bias ---
    y = _flash_attention_proj(q, k, v, wproj3, bproj_2d, x.dtype)      # (B, N, C)
    return y


def attention_reference(x, wqkv, wproj, bproj, *, num_heads):
    """Pure-JAX f32 reference mirroring the PyTorch forward exactly."""
    B, N, C = x.shape
    hd = C // num_heads
    scale = hd ** (-0.5)
    qkv = x @ wqkv.T
    qkv = qkv.reshape(B, N, 3, num_heads, hd).transpose(2, 0, 3, 1, 4)
    q, k, v = qkv[0], qkv[1], qkv[2]
    attn = jnp.einsum("bhnd,bhmd->bhnm", q, k) * scale
    attn = jax.nn.softmax(attn, axis=-1)
    out = jnp.einsum("bhnm,bhmd->bhnd", attn, v)
    out = out.transpose(0, 2, 1, 3).reshape(B, N, C)
    return out @ wproj.T + bproj


if __name__ == "__main__":
    B, N, C = 2, 8, 32
    num_heads = 8

    key = jax.random.PRNGKey(0)
    kx, kq, kp, kb = jax.random.split(key, 4)
    x = jax.random.normal(kx, (B, N, C), dtype=jnp.float32)
    wqkv = jax.random.normal(kq, (3 * C, C), dtype=jnp.float32) * 0.05   # qkv_bias=False
    wproj = jax.random.normal(kp, (C, C), dtype=jnp.float32) * 0.05
    bproj = jax.random.normal(kb, (C,), dtype=jnp.float32) * 0.05

    y = attention_forward(x, wqkv, wproj, bproj, num_heads=num_heads)
    y = jax.block_until_ready(y)

    y_ref = attention_reference(x, wqkv, wproj, bproj, num_heads=num_heads)
    # bf16 MXU inputs + approx reciprocal -> loosened tolerance vs the f32 reference
    assert jnp.allclose(y, y_ref, atol=3e-2, rtol=3e-2), "mismatch vs reference"

    print("KERNEL_OK")
</pallas_src>

<mosaic_0001>
module attributes {stable_mosaic.version = 11 : i64} {
  func.func @_qkv_gemm_kernel(%arg0: i32, %arg1: memref<16x32xf32, #tpu.memory_space<vmem>>, %arg2: memref<32x96xbf16, #tpu.memory_space<vmem>>, %arg3: memref<16x96xbf16, #tpu.memory_space<vmem>>) attributes {dimension_semantics = [#tpu.dimension_semantics<parallel>], iteration_bounds = array<i64: 1>, scalar_prefetch = 0 : i64, scratch_operands = 0 : i64, tpu.core_type = #tpu.core_type<tc>, window_params = [{transform_indices = @transform_0, window_bounds = array<i64: 16, 32>}, {pipeline_mode = #tpu.pipeline_mode<synchronous>, transform_indices = @transform_1, window_bounds = array<i64: 32, 96>}, {transform_indices = @transform_2, window_bounds = array<i64: 16, 96>}]} {
    %c0 = arith.constant 0 : index
    %c0_0 = arith.constant 0 : index
    %0 = vector.load %arg1[%c0, %c0_0] : memref<16x32xf32, #tpu.memory_space<vmem>>, vector<16x32xf32>
    %1 = arith.truncf %0 : vector<16x32xf32> to vector<16x32xbf16>
    %c0_1 = arith.constant 0 : index
    %c0_2 = arith.constant 0 : index
    %2 = vector.load %arg2[%c0_1, %c0_2] : memref<32x96xbf16, #tpu.memory_space<vmem>>, vector<32x96xbf16>
    %cst = arith.constant dense<0.000000e+00> : vector<16x96xf32>
    %3 = tpu.matmul %1, %2, %cst {dimension_numbers = #tpu.dot_dimension_numbers<[1], [0], [0], [1], [0, 0, 1, 1], [], []>} : vector<16x32xbf16>, vector<32x96xbf16>, vector<16x96xf32> -> vector<16x96xf32>
    %4 = arith.truncf %3 : vector<16x96xf32> to vector<16x96xbf16>
    %c0_3 = arith.constant 0 : index
    %c0_4 = arith.constant 0 : index
    %5 = vector.load %arg3[%c0_3, %c0_4] : memref<16x96xbf16, #tpu.memory_space<vmem>>, vector<16x96xbf16>
    tpu.vector_store %arg3[%c0_3, %c0_4], %4 {strides = array<i32>} : memref<16x96xbf16, #tpu.memory_space<vmem>>, vector<16x96xbf16>,
    return
  }
  func.func @transform_0(%arg0: i32) -> (i32, i32) {
    %c0_i32 = arith.constant 0 : i32
    %c0_i32_0 = arith.constant 0 : i32
    return %arg0, %c0_i32 : i32, i32
  }
  func.func @transform_1(%arg0: i32) -> (i32, i32) {
    %c0_i32 = arith.constant 0 : i32
    %c0_i32_0 = arith.constant 0 : i32
    %c0_i32_1 = arith.constant 0 : i32
    return %c0_i32, %c0_i32_0 : i32, i32
  }
  func.func @transform_2(%arg0: i32) -> (i32, i32) {
    %c0_i32 = arith.constant 0 : i32
    %c0_i32_0 = arith.constant 0 : i32
    return %arg0, %c0_i32 : i32, i32
  }
}

module attributes {stable_mosaic.version = 11 : i64} {
  func.func @_attn_proj_kernel(%arg0: i32, %arg1: i32, %arg2: i32, %arg3: memref<1x8x8x4xbf16, #tpu.memory_space<vmem>>, %arg4: memref<1x8x8x4xbf16, #tpu.memory_space<vmem>>, %arg5: memref<1x8x8x4xbf16, #tpu.memory_space<vmem>>, %arg6: memref<8x4x32xbf16, #tpu.memory_space<vmem>>, %arg7: memref<1x32xf32, #tpu.memory_space<vmem>>, %arg8: memref<1x8x32xf32, #tpu.memory_space<vmem>>, %arg9: memref<8x8x1xf32, #tpu.memory_space<vmem>>, %arg10: memref<8x8x1xf32, #tpu.memory_space<vmem>>, %arg11: memref<8x8x4xf32, #tpu.memory_space<vmem>>) attributes {dimension_semantics = [#tpu.dimension_semantics<parallel>, #tpu.dimension_semantics<parallel>, #tpu.dimension_semantics<arbitrary>], iteration_bounds = array<i64: 2, 1, 1>, scalar_prefetch = 0 : i64, scratch_operands = 3 : i64, tpu.core_type = #tpu.core_type<tc>, window_params = [{transform_indices = @transform_0, window_bounds = array<i64: 1, 8, 8, 4>}, {transform_indices = @transform_1, window_bounds = array<i64: 1, 8, 8, 4>}, {transform_indices = @transform_2, window_bounds = array<i64: 1, 8, 8, 4>}, {pipeline_mode = #tpu.pipeline_mode<synchronous>, transform_indices = @transform_3, window_bounds = array<i64: 8, 4, 32>}, {pipeline_mode = #tpu.pipeline_mode<synchronous>, transform_indices = @transform_4, window_bounds = array<i64: 1, 32>}, {transform_indices = @transform_5, window_bounds = array<i64: 1, 8, 32>}]} {
    %c0_i32 = arith.constant 0 : i32
    %0 = arith.cmpi eq, %arg2, %c0_i32 : i32
    %1 = arith.extui %0 : i1 to i32
    %c0_i32_0 = arith.constant 0 : i32
    %2 = arith.cmpi ne, %1, %c0_i32_0 : i32
    scf.if %2 {
      %cst_35 = arith.constant 0xFF800000 : f32
      %36 = vector.broadcast %cst_35 : f32 to vector<8x8x1xf32>
      %c0_36 = arith.constant 0 : index
      %c0_37 = arith.constant 0 : index
      %c0_38 = arith.constant 0 : index
      %37 = vector.load %arg9[%c0_36, %c0_37, %c0_38] : memref<8x8x1xf32, #tpu.memory_space<vmem>>, vector<8x8x1xf32>
      tpu.vector_store %arg9[%c0_36, %c0_37, %c0_38], %36 {strides = array<i32>} : memref<8x8x1xf32, #tpu.memory_space<vmem>>, vector<8x8x1xf32>,
      %cst_39 = arith.constant 0.000000e+00 : f32
      %38 = vector.broadcast %cst_39 : f32 to vector<8x8x1xf32>
      %c0_40 = arith.constant 0 : index
      %c0_41 = arith.constant 0 : index
      %c0_42 = arith.constant 0 : index
      %39 = vector.load %arg10[%c0_40, %c0_41, %c0_42] : memref<8x8x1xf32, #tpu.memory_space<vmem>>, vector<8x8x1xf32>
      tpu.vector_store %arg10[%c0_40, %c0_41, %c0_42], %38 {strides = array<i32>} : memref<8x8x1xf32, #tpu.memory_space<vmem>>, vector<8x8x1xf32>,
      %cst_43 = arith.constant 0.000000e+00 : f32
      %40 = vector.broadcast %cst_43 : f32 to vector<8x8x4xf32>
      %c0_44 = arith.constant 0 : index
      %c0_45 = arith.constant 0 : index
      %c0_46 = arith.constant 0 : index
      %41 = vector.load %arg11[%c0_44, %c0_45, %c0_46] : memref<8x8x4xf32, #tpu.memory_space<vmem>>, vector<8x8x4xf32>
      tpu.vector_store %arg11[%c0_44, %c0_45, %c0_46], %40 {strides = array<i32>} : memref<8x8x4xf32, #tpu.memory_space<vmem>>, vector<8x8x4xf32>,
    } else {
    }
    %c0 = arith.constant 0 : index
    %c0_1 = arith.constant 0 : index
    %c0_2 = arith.constant 0 : index
    %c0_3 = arith.constant 0 : index
    %3 = vector.load %arg3[%c0, %c0_1, %c0_2, %c0_3] : memref<1x8x8x4xbf16, #tpu.memory_space<vmem>>, vector<1x8x8x4xbf16>
    %4 = vector.shape_cast %3 : vector<1x8x8x4xbf16> to vector<8x8x4xbf16>
    %c0_4 = arith.constant 0 : index
    %c0_5 = arith.constant 0 : index
    %c0_6 = arith.constant 0 : index
    %c0_7 = arith.constant 0 : index
    %5 = vector.load %arg4[%c0_4, %c0_5, %c0_6, %c0_7] : memref<1x8x8x4xbf16, #tpu.memory_space<vmem>>, vector<1x8x8x4xbf16>
    %6 = vector.shape_cast %5 : vector<1x8x8x4xbf16> to vector<8x8x4xbf16>
    %c0_8 = arith.constant 0 : index
    %c0_9 = arith.constant 0 : index
    %c0_10 = arith.constant 0 : index
    %c0_11 = arith.constant 0 : index
    %7 = vector.load %arg5[%c0_8, %c0_9, %c0_10, %c0_11] : memref<1x8x8x4xbf16, #tpu.memory_space<vmem>>, vector<1x8x8x4xbf16>
    %8 = vector.shape_cast %7 : vector<1x8x8x4xbf16> to vector<8x8x4xbf16>
    "tpu.trace_start"() <{level = 10 : i32, message = "hqd,hkd->hqk"}> : () -> ()
    %cst = arith.constant dense<0.000000e+00> : vector<8x8x8xf32>
    %9 = tpu.matmul %4, %6, %cst {dimension_numbers = #tpu.dot_dimension_numbers<[2], [2], [1], [1], [0, 0, 0, 1, 1, 1], [0], [0]>} : vector<8x8x4xbf16>, vector<8x8x4xbf16>, vector<8x8x8xf32> -> vector<8x8x8xf32>
    "tpu.trace_stop"() : () -> ()
    %c0_12 = arith.constant 0 : index
    %c0_13 = arith.constant 0 : index
    %c0_14 = arith.constant 0 : index
    %10 = vector.load %arg9[%c0_12, %c0_13, %c0_14] : memref<8x8x1xf32, #tpu.memory_space<vmem>>, vector<8x8x1xf32>
    %cst_15 = arith.constant dense<0xFF800000> : vector<8x8xf32>
    %11 = vector.multi_reduction <maximumf>, %9, %cst_15 [2] : vector<8x8x8xf32> to vector<8x8xf32>
    %12 = vector.shape_cast %11 : vector<8x8xf32> to vector<8x8x1xf32>
    %13 = arith.maximumf %10, %12 : vector<8x8x1xf32>
    %14 = arith.subf %10, %13 : vector<8x8x1xf32>
    %15 = math.exp %14 : vector<8x8x1xf32>
    %16 = vector.broadcast %13 : vector<8x8x1xf32> to vector<8x8x8xf32>
    %17 = arith.subf %9, %16 : vector<8x8x8xf32>
    %18 = math.exp %17 : vector<8x8x8xf32>
    %c0_16 = arith.constant 0 : index
    %c0_17 = arith.constant 0 : index
    %c0_18 = arith.constant 0 : index
    %19 = vector.load %arg10[%c0_16, %c0_17, %c0_18] : memref<8x8x1xf32, #tpu.memory_space<vmem>>, vector<8x8x1xf32>
    %20 = arith.mulf %15, %19 : vector<8x8x1xf32>
    %cst_19 = arith.constant dense<0.000000e+00> : vector<8x8xf32>
    %21 = vector.multi_reduction <add>, %18, %cst_19 [2] : vector<8x8x8xf32> to vector<8x8xf32>
    %22 = vector.shape_cast %21 : vector<8x8xf32> to vector<8x8x1xf32>
    %23 = arith.addf %20, %22 : vector<8x8x1xf32>
    %c0_20 = arith.constant 0 : index
    %c0_21 = arith.constant 0 : index
    %c0_22 = arith.constant 0 : index
    %24 = vector.load %arg10[%c0_20, %c0_21, %c0_22] : memref<8x8x1xf32, #tpu.memory_space<vmem>>, vector<8x8x1xf32>
    tpu.vector_store %arg10[%c0_20, %c0_21, %c0_22], %23 {strides = array<i32>} : memref<8x8x1xf32, #tpu.memory_space<vmem>>, vector<8x8x1xf32>,
    %c0_23 = arith.constant 0 : index
    %c0_24 = arith.constant 0 : index
    %c0_25 = arith.constant 0 : index
    %25 = vector.load %arg11[%c0_23, %c0_24, %c0_25] : memref<8x8x4xf32, #tpu.memory_space<vmem>>, vector<8x8x4xf32>
    %26 = vector.broadcast %15 : vector<8x8x1xf32> to vector<8x8x4xf32>
    %27 = arith.mulf %26, %25 : vector<8x8x4xf32>
    %28 = arith.truncf %18 : vector<8x8x8xf32> to vector<8x8x8xbf16>
    "tpu.trace_start"() <{level = 10 : i32, message = "hqk,hkd->hqd"}> : () -> ()
    %cst_26 = arith.constant dense<0.000000e+00> : vector<8x8x4xf32>
    %29 = tpu.matmul %28, %8, %cst_26 {dimension_numbers = #tpu.dot_dimension_numbers<[2], [1], [1], [2], [0, 0, 0, 1, 1, 2], [0], [0]>} : vector<8x8x8xbf16>, vector<8x8x4xbf16>, vector<8x8x4xf32> -> vector<8x8x4xf32>
    "tpu.trace_stop"() : () -> ()
    %30 = arith.addf %27, %29 : vector<8x8x4xf32>
    %c0_27 = arith.constant 0 : index
    %c0_28 = arith.constant 0 : index
    %c0_29 = arith.constant 0 : index
    %31 = vector.load %arg11[%c0_27, %c0_28, %c0_29] : memref<8x8x4xf32, #tpu.memory_space<vmem>>, vector<8x8x4xf32>
    tpu.vector_store %arg11[%c0_27, %c0_28, %c0_29], %30 {strides = array<i32>} : memref<8x8x4xf32, #tpu.memory_space<vmem>>, vector<8x8x4xf32>,
    %c0_30 = arith.constant 0 : index
    %c0_31 = arith.constant 0 : index
    %c0_32 = arith.constant 0 : index
    %32 = vector.load %arg9[%c0_30, %c0_31, %c0_32] : memref<8x8x1xf32, #tpu.memory_space<vmem>>, vector<8x8x1xf32>
    tpu.vector_store %arg9[%c0_30, %c0_31, %c0_32], %13 {strides = array<i32>} : memref<8x8x1xf32, #tpu.memory_space<vmem>>, vector<8x8x1xf32>,
    %c0_i32_33 = arith.constant 0 : i32
    %33 = arith.cmpi eq, %arg2, %c0_i32_33 : i32
    %34 = arith.extui %33 : i1 to i32
    %c0_i32_34 = arith.constant 0 : i32
    %35 = arith.cmpi ne, %34, %c0_i32_34 : i32
    scf.if %35 {
      %c0_35 = arith.constant 0 : index
      %c0_36 = arith.constant 0 : index
      %c0_37 = arith.constant 0 : index
      %36 = vector.load %arg10[%c0_35, %c0_36, %c0_37] : memref<8x8x1xf32, #tpu.memory_space<vmem>>, vector<8x8x1xf32>
      %37 = tpu.reciprocal %36 {approx = true} : vector<8x8x1xf32> -> vector<8x8x1xf32>
      %c0_38 = arith.constant 0 : index
      %c0_39 = arith.constant 0 : index
      %c0_40 = arith.constant 0 : index
      %38 = vector.load %arg11[%c0_38, %c0_39, %c0_40] : memref<8x8x4xf32, #tpu.memory_space<vmem>>, vector<8x8x4xf32>
      %39 = vector.broadcast %37 : vector<8x8x1xf32> to vector<8x8x4xf32>
      %40 = arith.mulf %38, %39 : vector<8x8x4xf32>
      %41 = arith.truncf %40 : vector<8x8x4xf32> to vector<8x8x4xbf16>
      %c0_41 = arith.constant 0 : index
      %c0_42 = arith.constant 0 : index
      %c0_43 = arith.constant 0 : index
      %42 = vector.load %arg6[%c0_41, %c0_42, %c0_43] : memref<8x4x32xbf16, #tpu.memory_space<vmem>>, vector<8x4x32xbf16>
      %43 = vector.extract_strided_slice %41 {offsets = [0, 0, 0], sizes = [1, 8, 4], strides = [1, 1, 1]} : vector<8x8x4xbf16> to vector<1x8x4xbf16>
      %44 = vector.shape_cast %43 : vector<1x8x4xbf16> to vector<8x4xbf16>
      %45 = vector.extract_strided_slice %42 {offsets = [0, 0, 0], sizes = [1, 4, 32], strides = [1, 1, 1]} : vector<8x4x32xbf16> to vector<1x4x32xbf16>
      %46 = vector.shape_cast %45 : vector<1x4x32xbf16> to vector<4x32xbf16>
      %cst_44 = arith.constant dense<0.000000e+00> : vector<8x32xf32>
      %47 = tpu.matmul %44, %46, %cst_44 {dimension_numbers = #tpu.dot_dimension_numbers<[1], [0], [0], [1], [0, 0, 1, 1], [], []>} : vector<8x4xbf16>, vector<4x32xbf16>, vector<8x32xf32> -> vector<8x32xf32>
      %48 = vector.extract_strided_slice %41 {offsets = [1, 0, 0], sizes = [1, 8, 4], strides = [1, 1, 1]} : vector<8x8x4xbf16> to vector<1x8x4xbf16>
      %49 = vector.shape_cast %48 : vector<1x8x4xbf16> to vector<8x4xbf16>
      %50 = vector.extract_strided_slice %42 {offsets = [1, 0, 0], sizes = [1, 4, 32], strides = [1, 1, 1]} : vector<8x4x32xbf16> to vector<1x4x32xbf16>
      %51 = vector.shape_cast %50 : vector<1x4x32xbf16> to vector<4x32xbf16>
      %cst_45 = arith.constant dense<0.000000e+00> : vector<8x32xf32>
      %52 = tpu.matmul %49, %51, %cst_45 {dimension_numbers = #tpu.dot_dimension_numbers<[1], [0], [0], [1], [0, 0, 1, 1], [], []>} : vector<8x4xbf16>, vector<4x32xbf16>, vector<8x32xf32> -> vector<8x32xf32>
      %53 = arith.addf %47, %52 : vector<8x32xf32>
      %54 = vector.extract_strided_slice %41 {offsets = [2, 0, 0], sizes = [1, 8, 4], strides = [1, 1, 1]} : vector<8x8x4xbf16> to vector<1x8x4xbf16>
      %55 = vector.shape_cast %54 : vector<1x8x4xbf16> to vector<8x4xbf16>
      %56 = vector.extract_strided_slice %42 {offsets = [2, 0, 0], sizes = [1, 4, 32], strides = [1, 1, 1]} : vector<8x4x32xbf16> to vector<1x4x32xbf16>
      %57 = vector.shape_cast %56 : vector<1x4x32xbf16> to vector<4x32xbf16>
      %cst_46 = arith.constant dense<0.000000e+00> : vector<8x32xf32>
      %58 = tpu.matmul %55, %57, %cst_46 {dimension_numbers = #tpu.dot_dimension_numbers<[1], [0], [0], [1], [0, 0, 1, 1], [], []>} : vector<8x4xbf16>, vector<4x32xbf16>, vector<8x32xf32> -> vector<8x32xf32>
      %59 = arith.addf %53, %58 : vector<8x32xf32>
      %60 = vector.extract_strided_slice %41 {offsets = [3, 0, 0], sizes = [1, 8, 4], strides = [1, 1, 1]} : vector<8x8x4xbf16> to vector<1x8x4xbf16>
      %61 = vector.shape_cast %60 : vector<1x8x4xbf16> to vector<8x4xbf16>
      %62 = vector.extract_strided_slice %42 {offsets = [3, 0, 0], sizes = [1, 4, 32], strides = [1, 1, 1]} : vector<8x4x32xbf16> to vector<1x4x32xbf16>
      %63 = vector.shape_cast %62 : vector<1x4x32xbf16> to vector<4x32xbf16>
      %cst_47 = arith.constant dense<0.000000e+00> : vector<8x32xf32>
      %64 = tpu.matmul %61, %63, %cst_47 {dimension_numbers = #tpu.dot_dimension_numbers<[1], [0], [0], [1], [0, 0, 1, 1], [], []>} : vector<8x4xbf16>, vector<4x32xbf16>, vector<8x32xf32> -> vector<8x32xf32>
      %65 = arith.addf %59, %64 : vector<8x32xf32>
      %66 = vector.extract_strided_slice %41 {offsets = [4, 0, 0], sizes = [1, 8, 4], strides = [1, 1, 1]} : vector<8x8x4xbf16> to vector<1x8x4xbf16>
      %67 = vector.shape_cast %66 : vector<1x8x4xbf16> to vector<8x4xbf16>
      %68 = vector.extract_strided_slice %42 {offsets = [4, 0, 0], sizes = [1, 4, 32], strides = [1, 1, 1]} : vector<8x4x32xbf16> to vector<1x4x32xbf16>
      %69 = vector.shape_cast %68 : vector<1x4x32xbf16> to vector<4x32xbf16>
      %cst_48 = arith.constant dense<0.000000e+00> : vector<8x32xf32>
      %70 = tpu.matmul %67, %69, %cst_48 {dimension_numbers = #tpu.dot_dimension_numbers<[1], [0], [0], [1], [0, 0, 1, 1], [], []>} : vector<8x4xbf16>, vector<4x32xbf16>, vector<8x32xf32> -> vector<8x32xf32>
      %71 = arith.addf %65, %70 : vector<8x32xf32>
      %72 = vector.extract_strided_slice %41 {offsets = [5, 0, 0], sizes = [1, 8, 4], strides = [1, 1, 1]} : vector<8x8x4xbf16> to vector<1x8x4xbf16>
      %73 = vector.shape_cast %72 : vector<1x8x4xbf16> to vector<8x4xbf16>
      %74 = vector.extract_strided_slice %42 {offsets = [5, 0, 0], sizes = [1, 4, 32], strides = [1, 1, 1]} : vector<8x4x32xbf16> to vector<1x4x32xbf16>
      %75 = vector.shape_cast %74 : vector<1x4x32xbf16> to vector<4x32xbf16>
      %cst_49 = arith.constant dense<0.000000e+00> : vector<8x32xf32>
      %76 = tpu.matmul %73, %75, %cst_49 {dimension_numbers = #tpu.dot_dimension_numbers<[1], [0], [0], [1], [0, 0, 1, 1], [], []>} : vector<8x4xbf16>, vector<4x32xbf16>, vector<8x32xf32> -> vector<8x32xf32>
      %77 = arith.addf %71, %76 : vector<8x32xf32>
      %78 = vector.extract_strided_slice %41 {offsets = [6, 0, 0], sizes = [1, 8, 4], strides = [1, 1, 1]} : vector<8x8x4xbf16> to vector<1x8x4xbf16>
      %79 = vector.shape_cast %78 : vector<1x8x4xbf16> to vector<8x4xbf16>
      %80 = vector.extract_strided_slice %42 {offsets = [6, 0, 0], sizes = [1, 4, 32], strides = [1, 1, 1]} : vector<8x4x32xbf16> to vector<1x4x32xbf16>
      %81 = vector.shape_cast %80 : vector<1x4x32xbf16> to vector<4x32xbf16>
      %cst_50 = arith.constant dense<0.000000e+00> : vector<8x32xf32>
      %82 = tpu.matmul %79, %81, %cst_50 {dimension_numbers = #tpu.dot_dimension_numbers<[1], [0], [0], [1], [0, 0, 1, 1], [], []>} : vector<8x4xbf16>, vector<4x32xbf16>, vector<8x32xf32> -> vector<8x32xf32>
      %83 = arith.addf %77, %82 : vector<8x32xf32>
      %84 = vector.extract_strided_slice %41 {offsets = [7, 0, 0], sizes = [1, 8, 4], strides = [1, 1, 1]} : vector<8x8x4xbf16> to vector<1x8x4xbf16>
      %85 = vector.shape_cast %84 : vector<1x8x4xbf16> to vector<8x4xbf16>
      %86 = vector.extract_strided_slice %42 {offsets = [7, 0, 0], sizes = [1, 4, 32], strides = [1, 1, 1]} : vector<8x4x32xbf16> to vector<1x4x32xbf16>
      %87 = vector.shape_cast %86 : vector<1x4x32xbf16> to vector<4x32xbf16>
      %cst_51 = arith.constant dense<0.000000e+00> : vector<8x32xf32>
      %88 = tpu.matmul %85, %87, %cst_51 {dimension_numbers = #tpu.dot_dimension_numbers<[1], [0], [0], [1], [0, 0, 1, 1], [], []>} : vector<8x4xbf16>, vector<4x32xbf16>, vector<8x32xf32> -> vector<8x32xf32>
      %89 = arith.addf %83, %88 : vector<8x32xf32>
      %c0_52 = arith.constant 0 : index
      %c0_53 = arith.constant 0 : index
      %90 = vector.load %arg7[%c0_52, %c0_53] : memref<1x32xf32, #tpu.memory_space<vmem>>, vector<1x32xf32>
      %91 = vector.broadcast %90 : vector<1x32xf32> to vector<8x32xf32>
      %92 = arith.addf %89, %91 : vector<8x32xf32>
      %c0_54 = arith.constant 0 : index
      %c0_55 = arith.constant 0 : index
      %c0_56 = arith.constant 0 : index
      %93 = vector.load %arg8[%c0_54, %c0_55, %c0_56] : memref<1x8x32xf32, #tpu.memory_space<vmem>>, vector<1x8x32xf32>
      %94 = vector.shape_cast %93 : vector<1x8x32xf32> to vector<8x32xf32>
      %95 = vector.shape_cast %92 : vector<8x32xf32> to vector<1x8x32xf32>
      tpu.vector_store %arg8[%c0_54, %c0_55, %c0_56], %95 {strides = array<i32>} : memref<1x8x32xf32, #tpu.memory_space<vmem>>, vector<1x8x32xf32>,
    } else {
    }
    return
  }
  func.func @transform_0(%arg0: i32, %arg1: i32, %arg2: i32) -> (i32, i32, i32, i32) {
    %c0_i32 = arith.constant 0 : i32
    %c0_i32_0 = arith.constant 0 : i32
    %c0_i32_1 = arith.constant 0 : i32
    return %arg0, %c0_i32, %arg1, %c0_i32_0 : i32, i32, i32, i32
  }
  func.func @transform_1(%arg0: i32, %arg1: i32, %arg2: i32) -> (i32, i32, i32, i32) {
    %c0_i32 = arith.constant 0 : i32
    %c0_i32_0 = arith.constant 0 : i32
    %c0_i32_1 = arith.constant 0 : i32
    return %arg0, %c0_i32, %arg2, %c0_i32_0 : i32, i32, i32, i32
  }
  func.func @transform_2(%arg0: i32, %arg1: i32, %arg2: i32) -> (i32, i32, i32, i32) {
    %c0_i32 = arith.constant 0 : i32
    %c0_i32_0 = arith.constant 0 : i32
    %c0_i32_1 = arith.constant 0 : i32
    return %arg0, %c0_i32, %arg2, %c0_i32_0 : i32, i32, i32, i32
  }
  func.func @transform_3(%arg0: i32, %arg1: i32, %arg2: i32) -> (i32, i32, i32) {
    %c0_i32 = arith.constant 0 : i32
    %c0_i32_0 = arith.constant 0 : i32
    %c0_i32_1 = arith.constant 0 : i32
    %c0_i32_2 = arith.constant 0 : i32
    return %c0_i32, %c0_i32_0, %c0_i32_1 : i32, i32, i32
  }
  func.func @transform_4(%arg0: i32, %arg1: i32, %arg2: i32) -> (i32, i32) {
    %c0_i32 = arith.constant 0 : i32
    %c0_i32_0 = arith.constant 0 : i32
    %c0_i32_1 = arith.constant 0 : i32
    return %c0_i32, %c0_i32_0 : i32, i32
  }
  func.func @transform_5(%arg0: i32, %arg1: i32, %arg2: i32) -> (i32, i32, i32) {
    %c0_i32 = arith.constant 0 : i32
    %c0_i32_0 = arith.constant 0 : i32
    return %arg0, %arg1, %c0_i32 : i32, i32, i32
  }
}

</mosaic_0001>

<llo_original>
// kernel: attention_forward.2
$region0: #{attention_forward.2}
  #allocation0 [shape = 'u32[]', space=smem, size = 0x4, offset = 0x4, fixed_abs, tag = 'smem constant byte address 0x4 - core index']
  #allocation1 [shape = 'u32[72,128]{1,0:T(1,128)}', space=vmem, size = 0x9000, scoped, tag = 'internal scratch']
  %s0 = inlined_call_operand.vmem [shape: f32[16,32], index: 0, kind: input, shape index: {}]
  %s1 = inlined_call_operand.vmem [shape: bf16[32,96], index: 1, kind: input, shape index: {}]
  %s2 = inlined_call_operand.vmem [shape: bf16[16,96], index: 2, kind: output, shape index: {}]
  %s3 = sld [smem:[#allocation0]]
  $region18: #{attention_forward.2} parent=0
    _
  %s5 = ssub.s32 1, %s3
  %s6 = scalar_select 0, %s5, %s3
  // Predicated region
  $region2: #{attention_forward.2} parent=0 // pred_check
    _
  $region3: #{attention_forward.2} parent=0 // pred_check_branch
    %8 = sbr.rel (0) target = $region5
  $region4: #{attention_forward.2} parent=0 // pred_region
    _
  $region5: #{attention_forward.2} parent=0 // pred_fallthru
    _
  // Predicated region
  $region6: #{attention_forward.2} parent=0 // pred_check
    _
  $region7: #{attention_forward.2} parent=0 // pred_check_branch
    %10 = sbr.rel (0) target = $region9
  $region8: #{attention_forward.2} parent=0 // pred_region
    _
  $region9: #{attention_forward.2} parent=0 // pred_fallthru
    _
  %v12 = vld [vmem:[%s0] sm:$0xff]
  %v13 = vld [vmem:[%s0 + $0x8] sm:$0xff]
  %v14 = vpack.c.bf16 %v13, %v12
  %v15 = vld [vmem:[%s1] sm:$0xf]
  %v16 = vld [vmem:[%s1 + $0x4] sm:$0xf]
  %v17 = vld [vmem:[%s1 + $0x8] sm:$0xf]
  %v18 = vld [vmem:[%s1 + $0xc] sm:$0xf]
  %v23 = vunpack.c.l.b16 %v15
  %v24 = vunpack.c.l.b16 %v16
  %v25 = vunpack.c.l.b16 %v17
  %v26 = vunpack.c.l.b16 %v18
  %v27 = vpack.c.b16 %v24, %v23
  %v28 = vpack.c.b16 %v26, %v25
  %vm31 = vcmask 261120
  %v33 = vsel %vm31, %v14, 0
  %35 = vmatpush.bf16.msra.mxu0 0
  %36 = vmatpush.bf16.msra.mxu0 0
  %37 = vmatpush.bf16.msra.mxu0 0
  %38 = vmatpush.bf16.msra.mxu0 0
  %39 = vmatpush.bf16.msra.mxu0 0
  %40 = vmatpush.bf16.msra.mxu0 0
  %41 = vmatpush.bf16.msra.mxu0 %v28
  %42 = vmatpush.bf16.msra.mxu0 %v27
  %43 = vmatmul.bf16.gmra.mxu0 %v33
  %v44 = vpop.f32.mrf.mxu0
  %v45 = vadd.f32 0.0, %v44
  %v46 = vpop.f32.mrf.mxu0
  %v47 = vadd.f32 0.0, %v46
  %48 = vdwg.mxu0
  %v49 = vpack.c.bf16 %v45, %v45
  %v50 = vpack.c.bf16 %v47, %v47
  %vm51 = vcmask 781312
  %52 = vst.msk [vmem:[%s2] sm:$0xf] %vm51, %v49
  %53 = vst.msk [vmem:[%s2 + $0x4] sm:$0xf] %vm51, %v50
  // Predicated region
  $region10: #{attention_forward.2} parent=0 // pred_check
    _
  $region11: #{attention_forward.2} parent=0 // pred_check_branch
    %55 = sbr.rel (0) target = $region13
  $region12: #{attention_forward.2} parent=0 // pred_region
    _
  $region13: #{attention_forward.2} parent=0 // pred_fallthru
    _
  // Predicated region
  $region14: #{attention_forward.2} parent=0 // pred_check
    _
  $region15: #{attention_forward.2} parent=0 // pred_check_branch
    %57 = sbr.rel (0) target = $region17
  $region16: #{attention_forward.2} parent=0 // pred_region
    _
  $region17: #{attention_forward.2} parent=0 // pred_fallthru
    _

// kernel: attention_forward.3
$region0: #{attention_forward.3}
  #allocation0 [shape = 'u32[]', space=smem, size = 0x4, offset = 0x4, fixed_abs, tag = 'smem constant byte address 0x4 - core index']
  #allocation1 [shape = 'u32[72,128]{1,0:T(1,128)}', space=vmem, size = 0x9000, scoped, tag = 'internal scratch']
  #allocation2 [shape = 'f32[8,8,1]{2,1,0:T(8,128)}', space=vmem, size = 0x8000, scoped, tag = 'scratch operand']
  #allocation3 [shape = 'f32[8,8,1]{2,1,0:T(8,128)}', space=vmem, size = 0x8000, scoped, tag = 'scratch operand']
  #allocation4 [shape = 'f32[8,8,4]{2,1,0:T(8,128)}', space=vmem, size = 0x8000, scoped, tag = 'scratch operand']
  %s0 = inlined_call_operand.vmem [shape: bf16[2,8,8,4], index: 0, kind: input, shape index: {}]
  %s1 = inlined_call_operand.vmem [shape: bf16[2,8,8,4], index: 1, kind: input, shape index: {}]
  %s2 = inlined_call_operand.vmem [shape: bf16[2,8,8,4], index: 2, kind: input, shape index: {}]
  %s3 = inlined_call_operand.vmem [shape: bf16[8,4,32], index: 3, kind: input, shape index: {}]
  %s4 = inlined_call_operand.vmem [shape: f32[1,32], index: 4, kind: input, shape index: {}]
  %s5 = inlined_call_operand.hbm [shape: f32[2,8,32], index: 5, kind: output, shape index: {}]
  %s6 = sld [smem:[#allocation0]]
  $region61: #{attention_forward.3} parent=0
    _
  %s8 = ssub.s32 1, %s6
  %s9 = scalar_select 0, %s8, %s6
  $region1: #{attention_forward.3} parent=0
    #allocation5 [shape = 'u8[8192]{0}', space=vmem, size = 0x2000, scoped, tag = 'output window, operand 0']
    #allocation6 [shape = 's32[2]{0}', space=sflag, size = 0x8, scoped, tag = 'scoped memory for attention_forward.3']
    %10 = vsyncpa [#allocation6], 0
    %s11 = scalar_lea.sflag [#allocation6], 1
    %12 = vsyncpa %s11, 0
    loop: start=0, step=1, limit=4
    $region2: #{attention_forward.3} parent=1 // loop_pre_header
      _
    $region3: #{attention_forward.3} parent=1 // loop_header
      %s14 = sphi 0, %s18
      %p15 = scmp.ge.s32.totalorder %s14, 4
      %s21 = sphi 0, %s40
      %s22 = sphi 0, %s36
      %s23 = sphi 0, %s32
      %s24 = sphi 0, %s21
      %s25 = sphi 0, %s22
      %s26 = sphi 0, %s23
      %s27 = sphi 0, %s24
      %s28 = sphi 0, %s25
      %s29 = sphi 0, %s26
      %s45 = sphi 0, %s47
      %s48 = sphi 0, %s45
      %s49 = sphi 0, %s48
      %s65 = sphi 0, %s49
      %s73 = sphi 0, %s75
      %s76 = sphi 0, %s73
      %s77 = sphi 0, %s76
      %s93 = sphi 0, %s77
      %s101 = sphi 0, %s103
      %s104 = sphi 0, %s101
      %s105 = sphi 0, %s104
      %s121 = sphi 0, %s105
      %s125 = sphi 0, %s125
      %s127 = sphi 0, %s125
      %s128 = sphi 0, %s127
      %s142 = sphi 0, %s128
      %s146 = sphi 0, %s146
      %s148 = sphi 0, %s146
      %s149 = sphi 0, %s148
      %s163 = sphi 0, %s149
      %s171 = sphi 0, %s173
      %s174 = sphi 0, %s171
      %s175 = sphi 0, %s174
      %s191 = sphi 0, %s175
    $region4: #{attention_forward.3} parent=1 // loop_header_branch
      %17 = sbr.rel (%p15) target = $region8
    $region5: #{attention_forward.3} parent=1 // loop_body
      %s19 = ssub.s32 %s14, 1
      %s20 = ssub.s32 %s14, 2
      %s30 = sadd.s32 1, %s23
      %p31 = scmp.ge.s32.totalorder %s30, 1
      %s32 = scalar_select %p31, 0, %s30
      %s33 = sadd.s32 1, %s22
      %s34 = scalar_select %p31, %s33, %s22
      %p35 = scmp.ge.s32.totalorder %s34, 1
      %s36 = scalar_select %p35, 0, %s34
      %s37 = sadd.s32 1, %s21
      %s38 = scalar_select %p35, %s37, %s21
      %p39 = scmp.ge.s32.totalorder %s38, 2
      %s40 = scalar_select %p39, 0, %s38
      %s41 = ssub.s32 %s21, %s40
      %s42 = ssub.s32 %s22, %s36
      %s43 = sor.u32 %s41, %s42
      %p44 = scmp.eq.s32.totalorder %s43, 0
      %s46 = sadd.s32 %s45, 1
      %s47 = scalar_select %p44, %s45, %s46
      %p50 = pneg %p44
      %p51 = scmp.eq.s32.totalorder %s14, 1
      %p52 = por %p50, %p51
      %p53 = scmp.ne.s32.totalorder %s45, %s48
      %p54 = scmp.eq.s32.totalorder %s14, 0
      %p55 = por %p53, %p54
      %p56 = scmp.ne.s32.totalorder %s45, %s48
      %p57 = scmp.eq.s32.totalorder %s19, 1
      %p58 = por %p56, %p57
      %p59 = scmp.ne.s32.totalorder %s48, %s49
      %p60 = scmp.eq.s32.totalorder %s19, 0
      %p61 = por %p59, %p60
      %p62 = scmp.ne.s32.totalorder %s48, %s49
      %p63 = scmp.eq.s32.totalorder %s20, 1
      %p64 = por %p62, %p63
      %p66 = scmp.ne.s32.totalorder %s49, %s65
      %p67 = scmp.eq.s32.totalorder %s20, 0
      %p68 = por %p66, %p67
      %s69 = ssub.s32 %s21, %s40
      %s70 = ssub.s32 %s23, %s32
      %s71 = sor.u32 %s69, %s70
      %p72 = scmp.eq.s32.totalorder %s71, 0
      %s74 = sadd.s32 %s73, 1
      %s75 = scalar_select %p72, %s73, %s74
      %p78 = pneg %p72
      %p79 = scmp.eq.s32.totalorder %s14, 1
      %p80 = por %p78, %p79
      %p81 = scmp.ne.s32.totalorder %s73, %s76
      %p82 = scmp.eq.s32.totalorder %s14, 0
      %p83 = por %p81, %p82
      %p84 = scmp.ne.s32.totalorder %s73, %s76
      %p85 = scmp.eq.s32.totalorder %s19, 1
      %p86 = por %p84, %p85
      %p87 = scmp.ne.s32.totalorder %s76, %s77
      %p88 = scmp.eq.s32.totalorder %s19, 0
      %p89 = por %p87, %p88
      %p90 = scmp.ne.s32.totalorder %s76, %s77
      %p91 = scmp.eq.s32.totalorder %s20, 1
      %p92 = por %p90, %p91
      %p94 = scmp.ne.s32.totalorder %s77, %s93
      %p95 = scmp.eq.s32.totalorder %s20, 0
      %p96 = por %p94, %p95
      %s97 = ssub.s32 %s21, %s40
      %s98 = ssub.s32 %s23, %s32
      %s99 = sor.u32 %s97, %s98
      %p100 = scmp.eq.s32.totalorder %s99, 0
      %s102 = sadd.s32 %s101, 1
      %s103 = scalar_select %p100, %s101, %s102
      %p106 = pneg %p100
      %p107 = scmp.eq.s32.totalorder %s14, 1
      %p108 = por %p106, %p107
      %p109 = scmp.ne.s32.totalorder %s101, %s104
      %p110 = scmp.eq.s32.totalorder %s14, 0
      %p111 = por %p109, %p110
      %p112 = scmp.ne.s32.totalorder %s101, %s104
      %p113 = scmp.eq.s32.totalorder %s19, 1
      %p114 = por %p112, %p113
      %p115 = scmp.ne.s32.totalorder %s104, %s105
      %p116 = scmp.eq.s32.totalorder %s19, 0
      %p117 = por %p115, %p116
      %p118 = scmp.ne.s32.totalorder %s104, %s105
      %p119 = scmp.eq.s32.totalorder %s20, 1
      %p120 = por %p118, %p119
      %p122 = scmp.ne.s32.totalorder %s105, %s121
      %p123 = scmp.eq.s32.totalorder %s20, 0
      %p124 = por %p122, %p123
      %s126 = sadd.s32 %s125, 1
      %p129 = scmp.eq.s32.totalorder %s14, 1
      %p130 = scmp.ne.s32.totalorder %s125, %s127
      %p131 = scmp.eq.s32.totalorder %s14, 0
      %p132 = por %p130, %p131
      %p133 = scmp.ne.s32.totalorder %s125, %s127
      %p134 = scmp.eq.s32.totalorder %s19, 1
      %p135 = por %p133, %p134
      %p136 = scmp.ne.s32.totalorder %s127, %s128
      %p137 = scmp.eq.s32.totalorder %s19, 0
      %p138 = por %p136, %p137
      %p139 = scmp.ne.s32.totalorder %s127, %s128
      %p140 = scmp.eq.s32.totalorder %s20, 1
      %p141 = por %p139, %p140
      %p143 = scmp.ne.s32.totalorder %s128, %s142
      %p144 = scmp.eq.s32.totalorder %s20, 0
      %p145 = por %p143, %p144
      %s147 = sadd.s32 %s146, 1
      %p150 = scmp.eq.s32.totalorder %s14, 1
      %p151 = scmp.ne.s32.totalorder %s146, %s148
      %p152 = scmp.eq.s32.totalorder %s14, 0
      %p153 = por %p151, %p152
      %p154 = scmp.ne.s32.totalorder %s146, %s148
      %p155 = scmp.eq.s32.totalorder %s19, 1
      %p156 = por %p154, %p155
      %p157 = scmp.ne.s32.totalorder %s148, %s149
      %p158 = scmp.eq.s32.totalorder %s19, 0
      %p159 = por %p157, %p158
      %p160 = scmp.ne.s32.totalorder %s148, %s149
      %p161 = scmp.eq.s32.totalorder %s20, 1
      %p162 = por %p160, %p161
      %p164 = scmp.ne.s32.totalorder %s149, %s163
      %p165 = scmp.eq.s32.totalorder %s20, 0
      %p166 = por %p164, %p165
      %s167 = ssub.s32 %s21, %s40
      %s168 = ssub.s32 %s22, %s36
      %s169 = sor.u32 %s167, %s168
      %p170 = scmp.eq.s32.totalorder %s169, 0
      %s172 = sadd.s32 %s171, 1
      %s173 = scalar_select %p170, %s171, %s172
      %p176 = pneg %p170
      %p177 = scmp.eq.s32.totalorder %s14, 1
      %p178 = por %p176, %p177
      %p179 = scmp.ne.s32.totalorder %s171, %s174
      %p180 = scmp.eq.s32.totalorder %s14, 0
      %p181 = por %p179, %p180
      %p182 = scmp.ne.s32.totalorder %s171, %s174
      %p183 = scmp.eq.s32.totalorder %s19, 1
      %p184 = por %p182, %p183
      %p185 = scmp.ne.s32.totalorder %s174, %s175
      %p186 = scmp.eq.s32.totalorder %s19, 0
      %p187 = por %p185, %p186
      %p188 = scmp.ne.s32.totalorder %s174, %s175
      %p189 = scmp.eq.s32.totalorder %s20, 1
      %p190 = por %p188, %p189
      %p192 = scmp.ne.s32.totalorder %s175, %s191
      %p193 = scmp.eq.s32.totalorder %s20, 0
      %p194 = por %p192, %p193
      %p195 = scmp.le.s32.totalorder 1, %s14
      %p196 = scmp.lt.s32.totalorder %s14, 3
      %p197 = pnand %p195, %p196
      %p198 = pneg %p197
      // Predicated region
      $region9: #{attention_forward.3} parent=5 // pred_check
        _
      $region10: #{attention_forward.3} parent=5 // pred_check_branch
        %200 = sbr.rel (%p197) target = $region12
      $region11: #{attention_forward.3} parent=5 // pred_region
        %s201 = ssub.s32 %s14, 1
        // Predicated region
        $region13: #{attention_forward.3} parent=11 // pred_check
          %p202 = pneg %p138
        $region14: #{attention_forward.3} parent=11 // pred_check_branch
          %204 = sbr.rel (%p202) target = $region16
        $region15: #{attention_forward.3} parent=11 // pred_region
          _
        $region16: #{attention_forward.3} parent=11 // pred_fallthru
          _
        // Predicated region
        $region17: #{attention_forward.3} parent=11 // pred_check
          %p205 = pneg %p159
        $region18: #{attention_forward.3} parent=11 // pred_check_branch
          %207 = sbr.rel (%p205) target = $region20
        $region19: #{attention_forward.3} parent=11 // pred_region
          _
        $region20: #{attention_forward.3} parent=11 // pred_fallthru
          _
      $region12: #{attention_forward.3} parent=5 // pred_fallthru
        _
      %p208 = scmp.lt.s32.totalorder %s14, 2
      // Predicated region
      $region21: #{attention_forward.3} parent=5 // pred_check
        %p209 = pneg %p208
      $region22: #{attention_forward.3} parent=5 // pred_check_branch
        %211 = sbr.rel (%p209) target = $region24
      $region23: #{attention_forward.3} parent=5 // pred_region
        // Predicated region
        $region25: #{attention_forward.3} parent=23 // pred_check
          %p212 = pneg %p55
        $region26: #{attention_forward.3} parent=23 // pred_check_branch
          %214 = sbr.rel (%p212) target = $region28
        $region27: #{attention_forward.3} parent=23 // pred_region
          %p215 = scmp.lt.s32.totalorder %s21, 1
          %s216 = scalar_select %p215, %s21, 1
          %p217 = scmp.lt.s32.totalorder %s22, 0
          %s218 = scalar_select %p217, %s22, 0
          %s219 = smul.addr %s216, 8
          %s220 = sadd.s32 %s218, %s219
          %s221 = smul.addr %s220, 4
          %s222 = scalar_lea.vmem %s0, %s221
        $region28: #{attention_forward.3} parent=23 // pred_fallthru
          _
        // Predicated region
        $region29: #{attention_forward.3} parent=23 // pred_check
          %p223 = pneg %p83
        $region30: #{attention_forward.3} parent=23 // pred_check_branch
          %225 = sbr.rel (%p223) target = $region32
        $region31: #{attention_forward.3} parent=23 // pred_region
          %p226 = scmp.lt.s32.totalorder %s21, 1
          %s227 = scalar_select %p226, %s21, 1
          %p228 = scmp.lt.s32.totalorder %s23, 0
          %s229 = scalar_select %p228, %s23, 0
          %s230 = smul.addr %s227, 8
          %s231 = sadd.s32 %s229, %s230
          %s232 = smul.addr %s231, 4
          %s233 = scalar_lea.vmem %s1, %s232
        $region32: #{attention_forward.3} parent=23 // pred_fallthru
          _
        // Predicated region
        $region33: #{attention_forward.3} parent=23 // pred_check
          %p234 = pneg %p111
        $region34: #{attention_forward.3} parent=23 // pred_check_branch
          %236 = sbr.rel (%p234) target = $region36
        $region35: #{attention_forward.3} parent=23 // pred_region
          %p237 = scmp.lt.s32.totalorder %s21, 1
          %s238 = scalar_select %p237, %s21, 1
          %p239 = scmp.lt.s32.totalorder %s23, 0
          %s240 = scalar_select %p239, %s23, 0
          %s241 = smul.addr %s238, 8
          %s242 = sadd.s32 %s240, %s241
          %s243 = smul.addr %s242, 4
          %s244 = scalar_lea.vmem %s2, %s243
        $region36: #{attention_forward.3} parent=23 // pred_fallthru
          _
      $region24: #{attention_forward.3} parent=5 // pred_fallthru
        _
      %p245 = scmp.le.s32.totalorder 1, %s14
      %p246 = scmp.lt.s32.totalorder %s14, 3
      %p247 = pnand %p245, %p246
      %p248 = pneg %p247
      // Predicated region
      $region37: #{attention_forward.3} parent=5 // pred_check
        _
      $region38: #{attention_forward.3} parent=5 // pred_check_branch
        %250 = sbr.rel (%p247) target = $region40
      $region39: #{attention_forward.3} parent=5 // pred_region
        %s251 = ssub.s32 %s14, 1
        %p252 = scmp.lt.s32.totalorder %s24, 1
        %s253 = scalar_select %p252, %s24, 1
        %p254 = scmp.lt.s32.totalorder %s25, 0
        %s255 = scalar_select %p254, %s25, 0
        %s256 = smul.addr %s253, 8
        %s257 = sadd.s32 %s255, %s256
        %s258 = smul.addr %s257, 4
        %s259 = scalar_lea.vmem %s0, %s258
        %p260 = pneg %p61
        %p261 = pneg %p58
        %p262 = scmp.lt.s32.totalorder %s24, 1
        %s263 = scalar_select %p262, %s24, 1
        %p264 = scmp.lt.s32.totalorder %s26, 0
        %s265 = scalar_select %p264, %s26, 0
        %s266 = smul.addr %s263, 8
        %s267 = sadd.s32 %s265, %s266
        %s268 = smul.addr %s267, 4
        %s269 = scalar_lea.vmem %s1, %s268
        %p270 = pneg %p89
        %p271 = pneg %p86
        %p272 = scmp.lt.s32.totalorder %s24, 1
        %s273 = scalar_select %p272, %s24, 1
        %p274 = scmp.lt.s32.totalorder %s26, 0
        %s275 = scalar_select %p274, %s26, 0
        %s276 = smul.addr %s273, 8
        %s277 = sadd.s32 %s275, %s276
        %s278 = smul.addr %s277, 4
        %s279 = scalar_lea.vmem %s2, %s278
        %p280 = pneg %p117
        %p281 = pneg %p114
        %p282 = pneg %p138
        %p283 = pneg %p135
        %p284 = pneg %p159
        %p285 = pneg %p156
        %p286 = pneg %p187
        %p287 = pneg %p184
        %s288 = sand.u32 %s174, 1
        %s289 = scalar_lea.sflag [#allocation6], %s288
        %s290 = sand.u32 %s174, 1
        %s291 = smul.addr %s290, 8
        %s292 = scalar_lea.vmem [#allocation5], %s291
        %p293 = scmp.lt.s32.totalorder %s24, 1
        %s294 = scalar_select %p293, %s24, 1
        %p295 = scmp.lt.s32.totalorder %s25, 0
        %s296 = scalar_select %p295, %s25, 0
        %s297 = smul.addr %s294, 8
        %s298 = sadd.s32 %s296, %s297
        %s299 = smul.addr %s298, 4
        %s300 = scalar_lea.vmem %s0, %s299
        %p301 = scmp.lt.s32.totalorder %s24, 1
        %s302 = scalar_select %p301, %s24, 1
        %p303 = scmp.lt.s32.totalorder %s26, 0
        %s304 = scalar_select %p303, %s26, 0
        %s305 = smul.addr %s302, 8
        %s306 = sadd.s32 %s304, %s305
        %s307 = smul.addr %s306, 4
        %s308 = scalar_lea.vmem %s1, %s307
        %p309 = scmp.lt.s32.totalorder %s24, 1
        %s310 = scalar_select %p309, %s24, 1
        %p311 = scmp.lt.s32.totalorder %s26, 0
        %s312 = scalar_select %p311, %s26, 0
        %s313 = smul.addr %s310, 8
        %s314 = sadd.s32 %s312, %s313
        %s315 = smul.addr %s314, 4
        %s316 = scalar_lea.vmem %s2, %s315
        %p318 = scmp.eq.s32.totalorder %s26, 0
        // Predicated region
        $region41: #{attention_forward.3} parent=39 // pred_check
          %p319 = pneg %p318
        $region42: #{attention_forward.3} parent=39 // pred_check_branch
          %321 = sbr.rel (%p319) target = $region44
        $region43: #{attention_forward.3} parent=39 // pred_region
          %vm322 = vcmask 7168
          %323 = vst.msk [vmem:[#allocation2] sm:$0xff] %vm322, -inf
          %324 = vst.msk [vmem:[#allocation2 + $0x8] sm:$0xff] %vm322, -inf
          %325 = vst.msk [vmem:[#allocation2 + $0x10] sm:$0xff] %vm322, -inf
          %326 = vst.msk [vmem:[#allocation2 + $0x18] sm:$0xff] %vm322, -inf
          %327 = vst.msk [vmem:[#allocation2 + $0x20] sm:$0xff] %vm322, -inf
          %328 = vst.msk [vmem:[#allocation2 + $0x28] sm:$0xff] %vm322, -inf
          %329 = vst.msk [vmem:[#allocation2 + $0x30] sm:$0xff] %vm322, -inf
          %330 = vst.msk [vmem:[#allocation2 + $0x38] sm:$0xff] %vm322, -inf
          %331 = vst.msk [vmem:[#allocation3] sm:$0xff] %vm322, 0.0
          %332 = vst.msk [vmem:[#allocation3 + $0x8] sm:$0xff] %vm322, 0.0
          %333 = vst.msk [vmem:[#allocation3 + $0x10] sm:$0xff] %vm322, 0.0
          %334 = vst.msk [vmem:[#allocation3 + $0x18] sm:$0xff] %vm322, 0.0
          %335 = vst.msk [vmem:[#allocation3 + $0x20] sm:$0xff] %vm322, 0.0
          %336 = vst.msk [vmem:[#allocation3 + $0x28] sm:$0xff] %vm322, 0.0
          %337 = vst.msk [vmem:[#allocation3 + $0x30] sm:$0xff] %vm322, 0.0
          %338 = vst.msk [vmem:[#allocation3 + $0x38] sm:$0xff] %vm322, 0.0
          %vm339 = vcmask 31744
          %340 = vst.msk [vmem:[#allocation4] sm:$0xff] %vm339, 0.0
          %341 = vst.msk [vmem:[#allocation4 + $0x8] sm:$0xff] %vm339, 0.0
          %342 = vst.msk [vmem:[#allocation4 + $0x10] sm:$0xff] %vm339, 0.0
          %343 = vst.msk [vmem:[#allocation4 + $0x18] sm:$0xff] %vm339, 0.0
          %344 = vst.msk [vmem:[#allocation4 + $0x20] sm:$0xff] %vm339, 0.0
          %345 = vst.msk [vmem:[#allocation4 + $0x28] sm:$0xff] %vm339, 0.0
          %346 = vst.msk [vmem:[#allocation4 + $0x30] sm:$0xff] %vm339, 0.0
          %347 = vst.msk [vmem:[#allocation4 + $0x38] sm:$0xff] %vm339, 0.0
        $region44: #{attention_forward.3} parent=39 // pred_fallthru
          _
        %v348 = vld [vmem:[%s300] sm:$0xf]
        %v349 = vld [vmem:[%s300 + $0x4] sm:$0xf]
        %v350 = vld [vmem:[%s300 + $0x8] sm:$0xf]
        %v351 = vld [vmem:[%s300 + $0xc] sm:$0xf]
        %v352 = vld [vmem:[%s300 + $0x10] sm:$0xf]
        %v353 = vld [vmem:[%s300 + $0x14] sm:$0xf]
        %v354 = vld [vmem:[%s300 + $0x18] sm:$0xf]
        %v355 = vld [vmem:[%s300 + $0x1c] sm:$0xf]
        %v356 = vld [vmem:[%s308] sm:$0xf]
        %v357 = vld [vmem:[%s308 + $0x4] sm:$0xf]
        %v358 = vld [vmem:[%s308 + $0x8] sm:$0xf]
        %v359 = vld [vmem:[%s308 + $0xc] sm:$0xf]
        %v360 = vld [vmem:[%s308 + $0x10] sm:$0xf]
        %v361 = vld [vmem:[%s308 + $0x14] sm:$0xf]
        %v362 = vld [vmem:[%s308 + $0x18] sm:$0xf]
        %v363 = vld [vmem:[%s308 + $0x1c] sm:$0xf]
        %v364 = vld [vmem:[%s316] sm:$0xf]
        %v365 = vld [vmem:[%s316 + $0x4] sm:$0xf]
        %v366 = vld [vmem:[%s316 + $0x8] sm:$0xf]
        %v367 = vld [vmem:[%s316 + $0xc] sm:$0xf]
        %v368 = vld [vmem:[%s316 + $0x10] sm:$0xf]
        %v369 = vld [vmem:[%s316 + $0x14] sm:$0xf]
        %v370 = vld [vmem:[%s316 + $0x18] sm:$0xf]
        %v371 = vld [vmem:[%s316 + $0x1c] sm:$0xf]
        %vm372 = vcmask 31744
        %v374 = vsel %vm372, %v348, 0
        %v377 = vsel %vm372, %v356, 0
        %379 = vmatpush.bf16.xpose.msra.mxu0 0
        %380 = vmatpush.bf16.xpose.msra.mxu0 0
        %381 = vmatpush.bf16.xpose.msra.mxu0 0
        %382 = vmatpush.bf16.xpose.msra.mxu0 0
        %383 = vmatpush.bf16.xpose.msra.mxu0 0
        %384 = vmatpush.bf16.xpose.msra.mxu0 0
        %385 = vmatpush.bf16.xpose.msra.mxu0 0
        %386 = vmatpush.bf16.xpose.msra.mxu0 %v377
        %387 = vmatmul.bf16.gmra.mxu0 %v374
        %v388 = vpop.f32.mrf.mxu0
        %v389 = vadd.f32 0.0, %v388
        %v390 = vpop.f32.mrf.mxu0
        %391 = vdwg.mxu0
        %v393 = vsel %vm372, %v349, 0
        %v396 = vsel %vm372, %v357, 0
        %398 = vmatpush.bf16.xpose.msra.mxu0 0
        %399 = vmatpush.bf16.xpose.msra.mxu0 0
        %400 = vmatpush.bf16.xpose.msra.mxu0 0
        %401 = vmatpush.bf16.xpose.msra.mxu0 0
        %402 = vmatpush.bf16.xpose.msra.mxu0 0
        %403 = vmatpush.bf16.xpose.msra.mxu0 0
        %404 = vmatpush.bf16.xpose.msra.mxu0 0
        %405 = vmatpush.bf16.xpose.msra.mxu0 %v396
        %406 = vmatmul.bf16.gmra.mxu0 %v393
        %v407 = vpop.f32.mrf.mxu0
        %v408 = vadd.f32 0.0, %v407
        %v409 = vpop.f32.mrf.mxu0
        %410 = vdwg.mxu0
        %v412 = vsel %vm372, %v350, 0
        %v415 = vsel %vm372, %v358, 0
        %417 = vmatpush.bf16.xpose.msra.mxu0 0
        %418 = vmatpush.bf16.xpose.msra.mxu0 0
        %419 = vmatpush.bf16.xpose.msra.mxu0 0
        %420 = vmatpush.bf16.xpose.msra.mxu0 0
        %421 = vmatpush.bf16.xpose.msra.mxu0 0
        %422 = vmatpush.bf16.xpose.msra.mxu0 0
        %423 = vmatpush.bf16.xpose.msra.mxu0 0
        %424 = vmatpush.bf16.xpose.msra.mxu0 %v415
        %425 = vmatmul.bf16.gmra.mxu0 %v412
        %v426 = vpop.f32.mrf.mxu0
        %v427 = vadd.f32 0.0, %v426
        %v428 = vpop.f32.mrf.mxu0
        %429 = vdwg.mxu0
        %v431 = vsel %vm372, %v351, 0
        %v434 = vsel %vm372, %v359, 0
        %436 = vmatpush.bf16.xpose.msra.mxu0 0
        %437 = vmatpush.bf16.xpose.msra.mxu0 0
        %438 = vmatpush.bf16.xpose.msra.mxu0 0
        %439 = vmatpush.bf16.xpose.msra.mxu0 0
        %440 = vmatpush.bf16.xpose.msra.mxu0 0
        %441 = vmatpush.bf16.xpose.msra.mxu0 0
        %442 = vmatpush.bf16.xpose.msra.mxu0 0
        %443 = vmatpush.bf16.xpose.msra.mxu0 %v434
        %444 = vmatmul.bf16.gmra.mxu0 %v431
        %v445 = vpop.f32.mrf.mxu0
        %v446 = vadd.f32 0.0, %v445
        %v447 = vpop.f32.mrf.mxu0
        %448 = vdwg.mxu0
        %v450 = vsel %vm372, %v352, 0
        %v453 = vsel %vm372, %v360, 0
        %455 = vmatpush.bf16.xpose.msra.mxu0 0
        %456 = vmatpush.bf16.xpose.msra.mxu0 0
        %457 = vmatpush.bf16.xpose.msra.mxu0 0
        %458 = vmatpush.bf16.xpose.msra.mxu0 0
        %459 = vmatpush.bf16.xpose.msra.mxu0 0
        %460 = vmatpush.bf16.xpose.msra.mxu0 0
        %461 = vmatpush.bf16.xpose.msra.mxu0 0
        %462 = vmatpush.bf16.xpose.msra.mxu0 %v453
        %463 = vmatmul.bf16.gmra.mxu0 %v450
        %v464 = vpop.f32.mrf.mxu0
        %v465 = vadd.f32 0.0, %v464
        %v466 = vpop.f32.mrf.mxu0
        %467 = vdwg.mxu0
        %v469 = vsel %vm372, %v353, 0
        %v472 = vsel %vm372, %v361, 0
        %474 = vmatpush.bf16.xpose.msra.mxu0 0
        %475 = vmatpush.bf16.xpose.msra.mxu0 0
        %476 = vmatpush.bf16.xpose.msra.mxu0 0
        %477 = vmatpush.bf16.xpose.msra.mxu0 0
        %478 = vmatpush.bf16.xpose.msra.mxu0 0
        %479 = vmatpush.bf16.xpose.msra.mxu0 0
        %480 = vmatpush.bf16.xpose.msra.mxu0 0
        %481 = vmatpush.bf16.xpose.msra.mxu0 %v472
        %482 = vmatmul.bf16.gmra.mxu0 %v469
        %v483 = vpop.f32.mrf.mxu0
        %v484 = vadd.f32 0.0, %v483
        %v485 = vpop.f32.mrf.mxu0
        %486 = vdwg.mxu0
        %v488 = vsel %vm372, %v354, 0
        %v491 = vsel %vm372, %v362, 0
        %493 = vmatpush.bf16.xpose.msra.mxu0 0
        %494 = vmatpush.bf16.xpose.msra.mxu0 0
        %495 = vmatpush.bf16.xpose.msra.mxu0 0
        %496 = vmatpush.bf16.xpose.msra.mxu0 0
        %497 = vmatpush.bf16.xpose.msra.mxu0 0
        %498 = vmatpush.bf16.xpose.msra.mxu0 0
        %499 = vmatpush.bf16.xpose.msra.mxu0 0
        %500 = vmatpush.bf16.xpose.msra.mxu0 %v491
        %501 = vmatmul.bf16.gmra.mxu0 %v488
        %v502 = vpop.f32.mrf.mxu0
        %v503 = vadd.f32 0.0, %v502
        %v504 = vpop.f32.mrf.mxu0
        %505 = vdwg.mxu0
        %v507 = vsel %vm372, %v355, 0
        %v510 = vsel %vm372, %v363, 0
        %512 = vmatpush.bf16.xpose.msra.mxu0 0
        %513 = vmatpush.bf16.xpose.msra.mxu0 0
        %514 = vmatpush.bf16.xpose.msra.mxu0 0
        %515 = vmatpush.bf16.xpose.msra.mxu0 0
        %516 = vmatpush.bf16.xpose.msra.mxu0 0
        %517 = vmatpush.bf16.xpose.msra.mxu0 0
        %518 = vmatpush.bf16.xpose.msra.mxu0 0
        %519 = vmatpush.bf16.xpose.msra.mxu0 %v510
        %520 = vmatmul.bf16.gmra.mxu0 %v507
        %v521 = vpop.f32.mrf.mxu0
        %v522 = vadd.f32 0.0, %v521
        %v523 = vpop.f32.mrf.mxu0
        %524 = vdwg.mxu0
        %v525 = vld [vmem:[#allocation2] sm:$0xff]
        %v526 = vld [vmem:[#allocation2 + $0x8] sm:$0xff]
        %v527 = vld [vmem:[#allocation2 + $0x10] sm:$0xff]
        %v528 = vld [vmem:[#allocation2 + $0x18] sm:$0xff]
        %v529 = vld [vmem:[#allocation2 + $0x20] sm:$0xff]
        %v530 = vld [vmem:[#allocation2 + $0x28] sm:$0xff]
        %v531 = vld [vmem:[#allocation2 + $0x30] sm:$0xff]
        %v532 = vld [vmem:[#allocation2 + $0x38] sm:$0xff]
        %vm533 = vcmask 64512
        %v534 = vsel %vm533, %v389, -inf
        %535 = vmax.xlane.f32.xlu0 %v534
        %v536 = vpop.xlane.xlu0 %535
        %v537 = vsel %vm533, %v408, -inf
        %538 = vmax.xlane.f32.xlu0 %v537
        %v539 = vpop.xlane.xlu0 %538
        %v540 = vsel %vm533, %v427, -inf
        %541 = vmax.xlane.f32.xlu0 %v540
        %v542 = vpop.xlane.xlu0 %541
        %v543 = vsel %vm533, %v446, -inf
        %544 = vmax.xlane.f32.xlu0 %v543
        %v545 = vpop.xlane.xlu0 %544
        %v546 = vsel %vm533, %v465, -inf
        %547 = vmax.xlane.f32.xlu0 %v546
        %v548 = vpop.xlane.xlu0 %547
        %v549 = vsel %vm533, %v484, -inf
        %550 = vmax.xlane.f32.xlu0 %v549
        %v551 = vpop.xlane.xlu0 %550
        %v552 = vsel %vm533, %v503, -inf
        %553 = vmax.xlane.f32.xlu0 %v552
        %v554 = vpop.xlane.xlu0 %553
        %v555 = vsel %vm533, %v522, -inf
        %556 = vmax.xlane.f32.xlu0 %v555
        %v557 = vpop.xlane.xlu0 %556
        %v558 = vmax.f32 %v525, %v536
        %v559 = vmax.f32 %v526, %v539
        %v560 = vmax.f32 %v527, %v542
        %v561 = vmax.f32 %v528, %v545
        %v562 = vmax.f32 %v529, %v548
        %v563 = vmax.f32 %v530, %v551
        %v564 = vmax.f32 %v531, %v554
        %v565 = vmax.f32 %v532, %v557
        %v566 = vsub.f32 %v525, %v558
        %v567 = vsub.f32 %v526, %v559
        %v568 = vsub.f32 %v527, %v560
        %v569 = vsub.f32 %v528, %v561
        %v570 = vsub.f32 %v529, %v562
        %v571 = vsub.f32 %v530, %v563
        %v572 = vsub.f32 %v531, %v564
        %v573 = vsub.f32 %v532, %v565
        %v574 = vmul.f32 %v566, 1.442695
        %v575 = vpow.pop %v574
        %v576 = vmul.f32 %v567, 1.442695
        %v577 = vpow.pop %v576
        %v578 = vmul.f32 %v568, 1.442695
        %v579 = vpow.pop %v578
        %v580 = vmul.f32 %v569, 1.442695
        %v581 = vpow.pop %v580
        %v582 = vmul.f32 %v570, 1.442695
        %v583 = vpow.pop %v582
        %v584 = vmul.f32 %v571, 1.442695
        %v585 = vpow.pop %v584
        %v586 = vmul.f32 %v572, 1.442695
        %v587 = vpow.pop %v586
        %v588 = vmul.f32 %v573, 1.442695
        %v589 = vpow.pop %v588
        %591 = vset.pattern.permute.xlu0 0
        %592 = vperm.xlu0 %591, %v558
        %v593 = vpop.permute.xlu0 %592
        %596 = vset.pattern.permute.xlu0 0
        %597 = vperm.xlu0 %596, %v559
        %v598 = vpop.permute.xlu0 %597
        %601 = vset.pattern.permute.xlu0 0
        %602 = vperm.xlu0 %601, %v560
        %v603 = vpop.permute.xlu0 %602
        %606 = vset.pattern.permute.xlu0 0
        %607 = vperm.xlu0 %606, %v561
        %v608 = vpop.permute.xlu0 %607
        %611 = vset.pattern.permute.xlu0 0
        %612 = vperm.xlu0 %611, %v562
        %v613 = vpop.permute.xlu0 %612
        %616 = vset.pattern.permute.xlu0 0
        %617 = vperm.xlu0 %616, %v563
        %v618 = vpop.permute.xlu0 %617
        %621 = vset.pattern.permute.xlu0 0
        %622 = vperm.xlu0 %621, %v564
        %v623 = vpop.permute.xlu0 %622
        %626 = vset.pattern.permute.xlu0 0
        %627 = vperm.xlu0 %626, %v565
        %v628 = vpop.permute.xlu0 %627
        %v630 = vsub.f32 %v389, %v593
        %v631 = vsub.f32 %v408, %v598
        %v632 = vsub.f32 %v427, %v603
        %v633 = vsub.f32 %v446, %v608
        %v634 = vsub.f32 %v465, %v613
        %v635 = vsub.f32 %v484, %v618
        %v636 = vsub.f32 %v503, %v623
        %v637 = vsub.f32 %v522, %v628
        %v638 = vmul.f32 %v630, 1.442695
        %v639 = vpow.pop %v638
        %v640 = vmul.f32 %v631, 1.442695
        %v641 = vpow.pop %v640
        %v642 = vmul.f32 %v632, 1.442695
        %v643 = vpow.pop %v642
        %v644 = vmul.f32 %v633, 1.442695
        %v645 = vpow.pop %v644
        %v646 = vmul.f32 %v634, 1.442695
        %v647 = vpow.pop %v646
        %v648 = vmul.f32 %v635, 1.442695
        %v649 = vpow.pop %v648
        %v650 = vmul.f32 %v636, 1.442695
        %v651 = vpow.pop %v650
        %v652 = vmul.f32 %v637, 1.442695
        %v653 = vpow.pop %v652
        %v654 = vld [vmem:[#allocation3] sm:$0xff]
        %v655 = vld [vmem:[#allocation3 + $0x8] sm:$0xff]
        %v656 = vld [vmem:[#allocation3 + $0x10] sm:$0xff]
        %v657 = vld [vmem:[#allocation3 + $0x18] sm:$0xff]
        %v658 = vld [vmem:[#allocation3 + $0x20] sm:$0xff]
        %v659 = vld [vmem:[#allocation3 + $0x28] sm:$0xff]
        %v660 = vld [vmem:[#allocation3 + $0x30] sm:$0xff]
        %v661 = vld [vmem:[#allocation3 + $0x38] sm:$0xff]
        %v662 = vmul.f32 %v575, %v654
        %v663 = vmul.f32 %v577, %v655
        %v664 = vmul.f32 %v579, %v656
        %v665 = vmul.f32 %v581, %v657
        %v666 = vmul.f32 %v583, %v658
        %v667 = vmul.f32 %v585, %v659
        %v668 = vmul.f32 %v587, %v660
        %v669 = vmul.f32 %v589, %v661
        %v670 = vsel %vm533, %v639, 0.0
        %671 = vadd.xlane.f32.xlu0 %v670
        %v672 = vpop.xlane.xlu0 %671
        %v673 = vsel %vm533, %v641, 0.0
        %674 = vadd.xlane.f32.xlu0 %v673
        %v675 = vpop.xlane.xlu0 %674
        %v676 = vsel %vm533, %v643, 0.0
        %677 = vadd.xlane.f32.xlu0 %v676
        %v678 = vpop.xlane.xlu0 %677
        %v679 = vsel %vm533, %v645, 0.0
        %680 = vadd.xlane.f32.xlu0 %v679
        %v681 = vpop.xlane.xlu0 %680
        %v682 = vsel %vm533, %v647, 0.0
        %683 = vadd.xlane.f32.xlu0 %v682
        %v684 = vpop.xlane.xlu0 %683
        %v685 = vsel %vm533, %v649, 0.0
        %686 = vadd.xlane.f32.xlu0 %v685
        %v687 = vpop.xlane.xlu0 %686
        %v688 = vsel %vm533, %v651, 0.0
        %689 = vadd.xlane.f32.xlu0 %v688
        %v690 = vpop.xlane.xlu0 %689
        %v691 = vsel %vm533, %v653, 0.0
        %692 = vadd.xlane.f32.xlu0 %v691
        %v693 = vpop.xlane.xlu0 %692
        %v694 = vadd.f32 %v662, %v672
        %v695 = vadd.f32 %v663, %v675
        %v696 = vadd.f32 %v664, %v678
        %v697 = vadd.f32 %v665, %v681
        %v698 = vadd.f32 %v666, %v684
        %v699 = vadd.f32 %v667, %v687
        %v700 = vadd.f32 %v668, %v690
        %v701 = vadd.f32 %v669, %v693
        %vm702 = vcmask 7168
        %703 = vst.msk [vmem:[#allocation3] sm:$0xff] %vm702, %v694
        %704 = vst.msk [vmem:[#allocation3 + $0x8] sm:$0xff] %vm702, %v695
        %705 = vst.msk [vmem:[#allocation3 + $0x10] sm:$0xff] %vm702, %v696
        %706 = vst.msk [vmem:[#allocation3 + $0x18] sm:$0xff] %vm702, %v697
        %707 = vst.msk [vmem:[#allocation3 + $0x20] sm:$0xff] %vm702, %v698
        %708 = vst.msk [vmem:[#allocation3 + $0x28] sm:$0xff] %vm702, %v699
        %709 = vst.msk [vmem:[#allocation3 + $0x30] sm:$0xff] %vm702, %v700
        %710 = vst.msk [vmem:[#allocation3 + $0x38] sm:$0xff] %vm702, %v701
        %v711 = vld [vmem:[#allocation4] sm:$0xff]
        %v712 = vld [vmem:[#allocation4 + $0x8] sm:$0xff]
        %v713 = vld [vmem:[#allocation4 + $0x10] sm:$0xff]
        %v714 = vld [vmem:[#allocation4 + $0x18] sm:$0xff]
        %v715 = vld [vmem:[#allocation4 + $0x20] sm:$0xff]
        %v716 = vld [vmem:[#allocation4 + $0x28] sm:$0xff]
        %v717 = vld [vmem:[#allocation4 + $0x30] sm:$0xff]
        %v718 = vld [vmem:[#allocation4 + $0x38] sm:$0xff]
        %720 = vset.pattern.permute.xlu0 0
        %721 = vperm.xlu0 %720, %v575
        %v722 = vpop.permute.xlu0 %721
        %725 = vset.pattern.permute.xlu0 0
        %726 = vperm.xlu0 %725, %v577
        %v727 = vpop.permute.xlu0 %726
        %730 = vset.pattern.permute.xlu0 0
        %731 = vperm.xlu0 %730, %v579
        %v732 = vpop.permute.xlu0 %731
        %735 = vset.pattern.permute.xlu0 0
        %736 = vperm.xlu0 %735, %v581
        %v737 = vpop.permute.xlu0 %736
        %740 = vset.pattern.permute.xlu0 0
        %741 = vperm.xlu0 %740, %v583
        %v742 = vpop.permute.xlu0 %741
        %745 = vset.pattern.permute.xlu0 0
        %746 = vperm.xlu0 %745, %v585
        %v747 = vpop.permute.xlu0 %746
        %750 = vset.pattern.permute.xlu0 0
        %751 = vperm.xlu0 %750, %v587
        %v752 = vpop.permute.xlu0 %751
        %755 = vset.pattern.permute.xlu0 0
        %756 = vperm.xlu0 %755, %v589
        %v757 = vpop.permute.xlu0 %756
        %v759 = vmul.f32 %v722, %v711
        %v760 = vmul.f32 %v727, %v712
        %v761 = vmul.f32 %v732, %v713
        %v762 = vmul.f32 %v737, %v714
        %v763 = vmul.f32 %v742, %v715
        %v764 = vmul.f32 %v747, %v716
        %v765 = vmul.f32 %v752, %v717
        %v766 = vmul.f32 %v757, %v718
        %v767 = vpack.c.bf16 %v639, %v639
        %v768 = vpack.c.bf16 %v641, %v641
        %v769 = vpack.c.bf16 %v643, %v643
        %v770 = vpack.c.bf16 %v645, %v645
        %v771 = vpack.c.bf16 %v647, %v647
        %v772 = vpack.c.bf16 %v649, %v649
        %v773 = vpack.c.bf16 %v651, %v651
        %v774 = vpack.c.bf16 %v653, %v653
        %v776 = vsel %vm533, %v767, 0
        %vm778 = vcmask 1043456
        %v780 = vsel %vm778, %v364, 0
        %782 = vmatpush.bf16.msra.mxu0 0
        %783 = vmatpush.bf16.msra.mxu0 0
        %784 = vmatpush.bf16.msra.mxu0 0
        %785 = vmatpush.bf16.msra.mxu0 0
        %786 = vmatpush.bf16.msra.mxu0 0
        %787 = vmatpush.bf16.msra.mxu0 0
        %788 = vmatpush.bf16.msra.mxu0 0
        %789 = vmatpush.bf16.msra.mxu0 %v780
        %790 = vmatmul.bf16.gmra.mxu0 %v776
        %v791 = vpop.f32.mrf.mxu0
        %v792 = vadd.f32 0.0, %v791
        %v793 = vpop.f32.mrf.mxu0
        %794 = vdwg.mxu0
        %v796 = vsel %vm533, %v768, 0
        %v799 = vsel %vm778, %v365, 0
        %801 = vmatpush.bf16.msra.mxu0 0
        %802 = vmatpush.bf16.msra.mxu0 0
        %803 = vmatpush.bf16.msra.mxu0 0
        %804 = vmatpush.bf16.msra.mxu0 0
        %805 = vmatpush.bf16.msra.mxu0 0
        %806 = vmatpush.bf16.msra.mxu0 0
        %807 = vmatpush.bf16.msra.mxu0 0
        %808 = vmatpush.bf16.msra.mxu0 %v799
        %809 = vmatmul.bf16.gmra.mxu0 %v796
        %v810 = vpop.f32.mrf.mxu0
        %v811 = vadd.f32 0.0, %v810
        %v812 = vpop.f32.mrf.mxu0
        %813 = vdwg.mxu0
        %v815 = vsel %vm533, %v769, 0
        %v818 = vsel %vm778, %v366, 0
        %820 = vmatpush.bf16.msra.mxu0 0
        %821 = vmatpush.bf16.msra.mxu0 0
        %822 = vmatpush.bf16.msra.mxu0 0
        %823 = vmatpush.bf16.msra.mxu0 0
        %824 = vmatpush.bf16.msra.mxu0 0
        %825 = vmatpush.bf16.msra.mxu0 0
        %826 = vmatpush.bf16.msra.mxu0 0
        %827 = vmatpush.bf16.msra.mxu0 %v818
        %828 = vmatmul.bf16.gmra.mxu0 %v815
        %v829 = vpop.f32.mrf.mxu0
        %v830 = vadd.f32 0.0, %v829
        %v831 = vpop.f32.mrf.mxu0
        %832 = vdwg.mxu0
        %v834 = vsel %vm533, %v770, 0
        %v837 = vsel %vm778, %v367, 0
        %839 = vmatpush.bf16.msra.mxu0 0
        %840 = vmatpush.bf16.msra.mxu0 0
        %841 = vmatpush.bf16.msra.mxu0 0
        %842 = vmatpush.bf16.msra.mxu0 0
        %843 = vmatpush.bf16.msra.mxu0 0
        %844 = vmatpush.bf16.msra.mxu0 0
        %845 = vmatpush.bf16.msra.mxu0 0
        %846 = vmatpush.bf16.msra.mxu0 %v837
        %847 = vmatmul.bf16.gmra.mxu0 %v834
        %v848 = vpop.f32.mrf.mxu0
        %v849 = vadd.f32 0.0, %v848
        %v850 = vpop.f32.mrf.mxu0
        %851 = vdwg.mxu0
        %v853 = vsel %vm533, %v771, 0
        %v856 = vsel %vm778, %v368, 0
        %858 = vmatpush.bf16.msra.mxu0 0
        %859 = vmatpush.bf16.msra.mxu0 0
        %860 = vmatpush.bf16.msra.mxu0 0
        %861 = vmatpush.bf16.msra.mxu0 0
        %862 = vmatpush.bf16.msra.mxu0 0
        %863 = vmatpush.bf16.msra.mxu0 0
        %864 = vmatpush.bf16.msra.mxu0 0
        %865 = vmatpush.bf16.msra.mxu0 %v856
        %866 = vmatmul.bf16.gmra.mxu0 %v853
        %v867 = vpop.f32.mrf.mxu0
        %v868 = vadd.f32 0.0, %v867
        %v869 = vpop.f32.mrf.mxu0
        %870 = vdwg.mxu0
        %v872 = vsel %vm533, %v772, 0
        %v875 = vsel %vm778, %v369, 0
        %877 = vmatpush.bf16.msra.mxu0 0
        %878 = vmatpush.bf16.msra.mxu0 0
        %879 = vmatpush.bf16.msra.mxu0 0
        %880 = vmatpush.bf16.msra.mxu0 0
        %881 = vmatpush.bf16.msra.mxu0 0
        %882 = vmatpush.bf16.msra.mxu0 0
        %883 = vmatpush.bf16.msra.mxu0 0
        %884 = vmatpush.bf16.msra.mxu0 %v875
        %885 = vmatmul.bf16.gmra.mxu0 %v872
        %v886 = vpop.f32.mrf.mxu0
        %v887 = vadd.f32 0.0, %v886
        %v888 = vpop.f32.mrf.mxu0
        %889 = vdwg.mxu0
        %v891 = vsel %vm533, %v773, 0
        %v894 = vsel %vm778, %v370, 0
        %896 = vmatpush.bf16.msra.mxu0 0
        %897 = vmatpush.bf16.msra.mxu0 0
        %898 = vmatpush.bf16.msra.mxu0 0
        %899 = vmatpush.bf16.msra.mxu0 0
        %900 = vmatpush.bf16.msra.mxu0 0
        %901 = vmatpush.bf16.msra.mxu0 0
        %902 = vmatpush.bf16.msra.mxu0 0
        %903 = vmatpush.bf16.msra.mxu0 %v894
        %904 = vmatmul.bf16.gmra.mxu0 %v891
        %v905 = vpop.f32.mrf.mxu0
        %v906 = vadd.f32 0.0, %v905
        %v907 = vpop.f32.mrf.mxu0
        %908 = vdwg.mxu0
        %v910 = vsel %vm533, %v774, 0
        %v913 = vsel %vm778, %v371, 0
        %915 = vmatpush.bf16.msra.mxu0 0
        %916 = vmatpush.bf16.msra.mxu0 0
        %917 = vmatpush.bf16.msra.mxu0 0
        %918 = vmatpush.bf16.msra.mxu0 0
        %919 = vmatpush.bf16.msra.mxu0 0
        %920 = vmatpush.bf16.msra.mxu0 0
        %921 = vmatpush.bf16.msra.mxu0 0
        %922 = vmatpush.bf16.msra.mxu0 %v913
        %923 = vmatmul.bf16.gmra.mxu0 %v910
        %v924 = vpop.f32.mrf.mxu0
        %v925 = vadd.f32 0.0, %v924
        %v926 = vpop.f32.mrf.mxu0
        %927 = vdwg.mxu0
        %v928 = vadd.f32 %v759, %v792
        %v929 = vadd.f32 %v760, %v811
        %v930 = vadd.f32 %v761, %v830
        %v931 = vadd.f32 %v762, %v849
        %v932 = vadd.f32 %v763, %v868
        %v933 = vadd.f32 %v764, %v887
        %v934 = vadd.f32 %v765, %v906
        %v935 = vadd.f32 %v766, %v925
        %936 = vst.msk [vmem:[#allocation4] sm:$0xff] %vm372, %v928
        %937 = vst.msk [vmem:[#allocation4 + $0x8] sm:$0xff] %vm372, %v929
        %938 = vst.msk [vmem:[#allocation4 + $0x10] sm:$0xff] %vm372, %v930
        %939 = vst.msk [vmem:[#allocation4 + $0x18] sm:$0xff] %vm372, %v931
        %940 = vst.msk [vmem:[#allocation4 + $0x20] sm:$0xff] %vm372, %v932
        %941 = vst.msk [vmem:[#allocation4 + $0x28] sm:$0xff] %vm372, %v933
        %942 = vst.msk [vmem:[#allocation4 + $0x30] sm:$0xff] %vm372, %v934
        %943 = vst.msk [vmem:[#allocation4 + $0x38] sm:$0xff] %vm372, %v935
        %944 = vst.msk [vmem:[#allocation2] sm:$0xff] %vm702, %v558
        %945 = vst.msk [vmem:[#allocation2 + $0x8] sm:$0xff] %vm702, %v559
        %946 = vst.msk [vmem:[#allocation2 + $0x10] sm:$0xff] %vm702, %v560
        %947 = vst.msk [vmem:[#allocation2 + $0x18] sm:$0xff] %vm702, %v561
        %948 = vst.msk [vmem:[#allocation2 + $0x20] sm:$0xff] %vm702, %v562
        %949 = vst.msk [vmem:[#allocation2 + $0x28] sm:$0xff] %vm702, %v563
        %950 = vst.msk [vmem:[#allocation2 + $0x30] sm:$0xff] %vm702, %v564
        %951 = vst.msk [vmem:[#allocation2 + $0x38] sm:$0xff] %vm702, %v565
        // Predicated region
        $region45: #{attention_forward.3} parent=39 // pred_check
          %p952 = pneg %p318
        $region46: #{attention_forward.3} parent=39 // pred_check_branch
          %954 = sbr.rel (%p952) target = $region48
        $region47: #{attention_forward.3} parent=39 // pred_region
          %v955 = vld [vmem:[#allocation3] sm:$0xff]
          %v956 = vld [vmem:[#allocation3 + $0x8] sm:$0xff]
          %v957 = vld [vmem:[#allocation3 + $0x10] sm:$0xff]
          %v958 = vld [vmem:[#allocation3 + $0x18] sm:$0xff]
          %v959 = vld [vmem:[#allocation3 + $0x20] sm:$0xff]
          %v960 = vld [vmem:[#allocation3 + $0x28] sm:$0xff]
          %v961 = vld [vmem:[#allocation3 + $0x30] sm:$0xff]
          %v962 = vld [vmem:[#allocation3 + $0x38] sm:$0xff]
          %v963 = vrcp.pop %v955
          %v964 = vrcp.pop %v956
          %v965 = vrcp.pop %v957
          %v966 = vrcp.pop %v958
          %v967 = vrcp.pop %v959
          %v968 = vrcp.pop %v960
          %v969 = vrcp.pop %v961
          %v970 = vrcp.pop %v962
          %v971 = vld [vmem:[#allocation4] sm:$0xff]
          %v972 = vld [vmem:[#allocation4 + $0x8] sm:$0xff]
          %v973 = vld [vmem:[#allocation4 + $0x10] sm:$0xff]
          %v974 = vld [vmem:[#allocation4 + $0x18] sm:$0xff]
          %v975 = vld [vmem:[#allocation4 + $0x20] sm:$0xff]
          %v976 = vld [vmem:[#allocation4 + $0x28] sm:$0xff]
          %v977 = vld [vmem:[#allocation4 + $0x30] sm:$0xff]
          %v978 = vld [vmem:[#allocation4 + $0x38] sm:$0xff]
          %980 = vset.pattern.permute.xlu0 0
          %981 = vperm.xlu0 %980, %v963
          %v982 = vpop.permute.xlu0 %981
          %985 = vset.pattern.permute.xlu0 0
          %986 = vperm.xlu0 %985, %v964
          %v987 = vpop.permute.xlu0 %986
          %990 = vset.pattern.permute.xlu0 0
          %991 = vperm.xlu0 %990, %v965
          %v992 = vpop.permute.xlu0 %991
          %995 = vset.pattern.permute.xlu0 0
          %996 = vperm.xlu0 %995, %v966
          %v997 = vpop.permute.xlu0 %996
          %1000 = vset.pattern.permute.xlu0 0
          %1001 = vperm.xlu0 %1000, %v967
          %v1002 = vpop.permute.xlu0 %1001
          %1005 = vset.pattern.permute.xlu0 0
          %1006 = vperm.xlu0 %1005, %v968
          %v1007 = vpop.permute.xlu0 %1006
          %1010 = vset.pattern.permute.xlu0 0
          %1011 = vperm.xlu0 %1010, %v969
          %v1012 = vpop.permute.xlu0 %1011
          %1015 = vset.pattern.permute.xlu0 0
          %1016 = vperm.xlu0 %1015, %v970
          %v1017 = vpop.permute.xlu0 %1016
          %v1019 = vmul.f32 %v971, %v982
          %v1020 = vmul.f32 %v972, %v987
          %v1021 = vmul.f32 %v973, %v992
          %v1022 = vmul.f32 %v974, %v997
          %v1023 = vmul.f32 %v975, %v1002
          %v1024 = vmul.f32 %v976, %v1007
          %v1025 = vmul.f32 %v977, %v1012
          %v1026 = vmul.f32 %v978, %v1017
          %v1027 = vpack.c.bf16 %v1019, %v1019
          %v1028 = vpack.c.bf16 %v1020, %v1020
          %v1029 = vpack.c.bf16 %v1021, %v1021
          %v1030 = vpack.c.bf16 %v1022, %v1022
          %v1031 = vpack.c.bf16 %v1023, %v1023
          %v1032 = vpack.c.bf16 %v1024, %v1024
          %v1033 = vpack.c.bf16 %v1025, %v1025
          %v1034 = vpack.c.bf16 %v1026, %v1026
          %v1035 = vld [vmem:[%s3] sm:$0x3]
          %v1036 = vld [vmem:[%s3 + $0x2] sm:$0x3]
          %v1037 = vld [vmem:[%s3 + $0x4] sm:$0x3]
          %v1038 = vld [vmem:[%s3 + $0x6] sm:$0x3]
          %v1039 = vld [vmem:[%s3 + $0x8] sm:$0x3]
          %v1040 = vld [vmem:[%s3 + $0xa] sm:$0x3]
          %v1041 = vld [vmem:[%s3 + $0xc] sm:$0x3]
          %v1042 = vld [vmem:[%s3 + $0xe] sm:$0x3]
          %v1044 = vsel %vm372, %v1028, 0
          %vm1046 = vcmask 1041408
          %v1048 = vsel %vm1046, %v1036, 0
          %1050 = vmatpush.bf16.msra.mxu0 0
          %1051 = vmatpush.bf16.msra.mxu0 0
          %1052 = vmatpush.bf16.msra.mxu0 0
          %1053 = vmatpush.bf16.msra.mxu0 0
          %1054 = vmatpush.bf16.msra.mxu0 0
          %1055 = vmatpush.bf16.msra.mxu0 0
          %1056 = vmatpush.bf16.msra.mxu0 0
          %1057 = vmatpush.bf16.msra.mxu0 %v1048
          %1058 = vmatmul.bf16.gmra.mxu0 %v1044
          %v1059 = vpop.f32.mrf.mxu0
          %v1060 = vadd.f32 0.0, %v1059
          %v1061 = vpop.f32.mrf.mxu0
          %1062 = vdwg.mxu0
          %v1064 = vsel %vm372, %v1027, 0
          %v1067 = vsel %vm1046, %v1035, 0
          %1069 = vmatpush.bf16.msra.mxu0 0
          %1070 = vmatpush.bf16.msra.mxu0 0
          %1071 = vmatpush.bf16.msra.mxu0 0
          %1072 = vmatpush.bf16.msra.mxu0 0
          %1073 = vmatpush.bf16.msra.mxu0 0
          %1074 = vmatpush.bf16.msra.mxu0 0
          %1075 = vmatpush.bf16.msra.mxu0 0
          %1076 = vmatpush.bf16.msra.mxu0 %v1067
          %1077 = vmatmul.bf16.gmra.mxu0 %v1064
          %v1078 = vpop.f32.mrf.mxu0
          %v1079 = vadd.f32 %v1060, %v1078
          %v1080 = vpop.f32.mrf.mxu0
          %1081 = vdwg.mxu0
          %v1083 = vsel %vm372, %v1029, 0
          %v1086 = vsel %vm1046, %v1037, 0
          %1088 = vmatpush.bf16.msra.mxu0 0
          %1089 = vmatpush.bf16.msra.mxu0 0
          %1090 = vmatpush.bf16.msra.mxu0 0
          %1091 = vmatpush.bf16.msra.mxu0 0
          %1092 = vmatpush.bf16.msra.mxu0 0
          %1093 = vmatpush.bf16.msra.mxu0 0
          %1094 = vmatpush.bf16.msra.mxu0 0
          %1095 = vmatpush.bf16.msra.mxu0 %v1086
          %1096 = vmatmul.bf16.gmra.mxu0 %v1083
          %v1097 = vpop.f32.mrf.mxu0
          %v1098 = vadd.f32 0.0, %v1097
          %v1099 = vpop.f32.mrf.mxu0
          %1100 = vdwg.mxu0
          %v1101 = vadd.f32 %v1079, %v1098
          %v1103 = vsel %vm372, %v1030, 0
          %v1106 = vsel %vm1046, %v1038, 0
          %1108 = vmatpush.bf16.msra.mxu0 0
          %1109 = vmatpush.bf16.msra.mxu0 0
          %1110 = vmatpush.bf16.msra.mxu0 0
          %1111 = vmatpush.bf16.msra.mxu0 0
          %1112 = vmatpush.bf16.msra.mxu0 0
          %1113 = vmatpush.bf16.msra.mxu0 0
          %1114 = vmatpush.bf16.msra.mxu0 0
          %1115 = vmatpush.bf16.msra.mxu0 %v1106
          %1116 = vmatmul.bf16.gmra.mxu0 %v1103
          %v1117 = vpop.f32.mrf.mxu0
          %v1118 = vadd.f32 0.0, %v1117
          %v1119 = vpop.f32.mrf.mxu0
          %1120 = vdwg.mxu0
          %v1121 = vadd.f32 %v1101, %v1118
          %v1123 = vsel %vm372, %v1031, 0
          %v1126 = vsel %vm1046, %v1039, 0
          %1128 = vmatpush.bf16.msra.mxu0 0
          %1129 = vmatpush.bf16.msra.mxu0 0
          %1130 = vmatpush.bf16.msra.mxu0 0
          %1131 = vmatpush.bf16.msra.mxu0 0
          %1132 = vmatpush.bf16.msra.mxu0 0
          %1133 = vmatpush.bf16.msra.mxu0 0
          %1134 = vmatpush.bf16.msra.mxu0 0
          %1135 = vmatpush.bf16.msra.mxu0 %v1126
          %1136 = vmatmul.bf16.gmra.mxu0 %v1123
          %v1137 = vpop.f32.mrf.mxu0
          %v1138 = vadd.f32 0.0, %v1137
          %v1139 = vpop.f32.mrf.mxu0
          %1140 = vdwg.mxu0
          %v1141 = vadd.f32 %v1121, %v1138
          %v1143 = vsel %vm372, %v1032, 0
          %v1146 = vsel %vm1046, %v1040, 0
          %1148 = vmatpush.bf16.msra.mxu0 0
          %1149 = vmatpush.bf16.msra.mxu0 0
          %1150 = vmatpush.bf16.msra.mxu0 0
          %1151 = vmatpush.bf16.msra.mxu0 0
          %1152 = vmatpush.bf16.msra.mxu0 0
          %1153 = vmatpush.bf16.msra.mxu0 0
          %1154 = vmatpush.bf16.msra.mxu0 0
          %1155 = vmatpush.bf16.msra.mxu0 %v1146
          %1156 = vmatmul.bf16.gmra.mxu0 %v1143
          %v1157 = vpop.f32.mrf.mxu0
          %v1158 = vadd.f32 0.0, %v1157
          %v1159 = vpop.f32.mrf.mxu0
          %1160 = vdwg.mxu0
          %v1161 = vadd.f32 %v1141, %v1158
          %v1163 = vsel %vm372, %v1033, 0
          %v1166 = vsel %vm1046, %v1041, 0
          %1168 = vmatpush.bf16.msra.mxu0 0
          %1169 = vmatpush.bf16.msra.mxu0 0
          %1170 = vmatpush.bf16.msra.mxu0 0
          %1171 = vmatpush.bf16.msra.mxu0 0
          %1172 = vmatpush.bf16.msra.mxu0 0
          %1173 = vmatpush.bf16.msra.mxu0 0
          %1174 = vmatpush.bf16.msra.mxu0 0
          %1175 = vmatpush.bf16.msra.mxu0 %v1166
          %1176 = vmatmul.bf16.gmra.mxu0 %v1163
          %v1177 = vpop.f32.mrf.mxu0
          %v1178 = vadd.f32 0.0, %v1177
          %v1179 = vpop.f32.mrf.mxu0
          %1180 = vdwg.mxu0
          %v1181 = vadd.f32 %v1161, %v1178
          %v1183 = vsel %vm372, %v1034, 0
          %v1186 = vsel %vm1046, %v1042, 0
          %1188 = vmatpush.bf16.msra.mxu0 0
          %1189 = vmatpush.bf16.msra.mxu0 0
          %1190 = vmatpush.bf16.msra.mxu0 0
          %1191 = vmatpush.bf16.msra.mxu0 0
          %1192 = vmatpush.bf16.msra.mxu0 0
          %1193 = vmatpush.bf16.msra.mxu0 0
          %1194 = vmatpush.bf16.msra.mxu0 0
          %1195 = vmatpush.bf16.msra.mxu0 %v1186
          %1196 = vmatmul.bf16.gmra.mxu0 %v1183
          %v1197 = vpop.f32.mrf.mxu0
          %v1198 = vadd.f32 0.0, %v1197
          %v1199 = vpop.f32.mrf.mxu0
          %1200 = vdwg.mxu0
          %v1201 = vadd.f32 %v1181, %v1198
          %v1202 = vld [vmem:[%s4] sm:$0x1]
          %v1204 = vperm.slane %v1202, 0
          %v1206 = vadd.f32 %v1201, %v1204
          %vm1207 = vcmask 261120
          %1208 = vst.msk [vmem:[%s292] sm:$0xff] %vm1207, %v1206
        $region48: #{attention_forward.3} parent=39 // pred_fallthru
          _
        %s1209 = sand.u32 %s174, 1
        %s1210 = scalar_lea.sflag [#allocation6], %s1209
        %s1211 = sand.u32 %s174, 1
        %s1212 = smul.addr %s1211, 8
        %s1213 = scalar_lea.vmem [#allocation5], %s1212
        // Predicated region
        $region49: #{attention_forward.3} parent=39 // pred_check
          %p1214 = pneg %p184
        $region50: #{attention_forward.3} parent=39 // pred_check_branch
          %1216 = sbr.rel (%p1214) target = $region52
        $region51: #{attention_forward.3} parent=39 // pred_region
          %1218 = vsyncadd %s1210, 0
          %s1219 = sadd.s32 %s25, %s24
          %s1220 = smul.addr %s1219, 8
          %s1221 = scalar_lea.hbm %s5, %s1220
          %s1223 = sshll.u32 %s1213, 4
          %s1224 = int_to_ptr.vmem [resolvable:$true] %s1223
          %s1225 = sshll.u32 %s1221, 4
          %s1226 = int_to_ptr.hbm [resolvable:$true] %s1225
          %1228 = dma.vmem_to_hbm [thread:$0]  %s1224, 128, %s1226, %s1210
        $region52: #{attention_forward.3} parent=39 // pred_fallthru
          _
      $region40: #{attention_forward.3} parent=5 // pred_fallthru
        _
      %p1229 = scmp.le.s32.totalorder 2, %s14
      // Predicated region
      $region53: #{attention_forward.3} parent=5 // pred_check
        %p1230 = pneg %p1229
      $region54: #{attention_forward.3} parent=5 // pred_check_branch
        %1232 = sbr.rel (%p1230) target = $region56
      $region55: #{attention_forward.3} parent=5 // pred_region
        %s1233 = ssub.s32 %s14, 2
        // Predicated region
        $region57: #{attention_forward.3} parent=55 // pred_check
          %p1234 = pneg %p190
        $region58: #{attention_forward.3} parent=55 // pred_check_branch
          %1236 = sbr.rel (%p1234) target = $region60
        $region59: #{attention_forward.3} parent=55 // pred_region
          %s1237 = sand.u32 %s175, 1
          %s1238 = scalar_lea.sflag [#allocation6], %s1237
          %s1239 = sand.u32 %s175, 1
          %s1240 = smul.addr %s1239, 8
          %s1241 = scalar_lea.vmem [#allocation5], %s1240
          %1243 = dma.done %s1238, 128
        $region60: #{attention_forward.3} parent=55 // pred_fallthru
          _
      $region56: #{attention_forward.3} parent=5 // pred_fallthru
        _
    $region6: #{attention_forward.3} parent=1 // loop_footer
      %s18 = sadd.s32 1, %s14
    $region7: #{attention_forward.3} parent=1 // loop_footer_branch
      %13 = sbr.rel target = $region3
    $region8: #{attention_forward.3} parent=1 // loop_exit
      _
    %1244 = vsyncpa [#allocation6], 1
    %s1245 = scalar_lea.sflag [#allocation6], 1
    %1246 = vsyncpa %s1245, 1

</llo_original>
